<compile_context>
chip_gen: v6e
topology: v6e:2x2x1
jax: 0.10.0
libtpu: 0.0.40
codegen_flags: <defaults>
</compile_context>

<pallas_src>
import numpy as np
import jax
import jax.numpy as jnp
from jax import lax
from jax.experimental import pallas as pl
from jax.experimental.pallas import tpu as pltpu


def bottleneck_kernel(x_ref, w1_ref, b1_ref, w2_ref, b2_ref, w3_ref, b3_ref,
                      out_ref, pad_ref):
    HW = x_ref.shape[1]
    P = w1_ref.shape[1]
    H = pad_ref.shape[0] - 2
    W = pad_ref.shape[1] - 2

    x2d = x_ref[0]                                            # (H*W, Cin) f32

    # ---- stage 1: 1x1 conv (BN scale folded into w1) + bias + ReLU ----
    h1 = jnp.dot(x2d.astype(jnp.bfloat16), w1_ref[...],
                 preferred_element_type=jnp.float32)
    h1 = jnp.maximum(h1 + b1_ref[...], 0.0)                   # (H*W, P) f32

    # ---- stage 2: 3x3 conv (pad=1) as a single fused im2col matmul ----
    # Zero + interior write each step keeps the kernel stateless across the
    # grid (safe under "parallel" megacore sharding).
    pad_ref[...] = jnp.zeros(pad_ref.shape, pad_ref.dtype)
    pad_ref[1:H + 1, 1:W + 1, :] = h1.reshape(H, W, P)
    patches = jnp.concatenate(
        [pad_ref[dy:dy + H, dx:dx + W, :].reshape(HW, P)
         for dy in range(3) for dx in range(3)],
        axis=-1)                                              # (H*W, 9P) f32
    h2 = jnp.dot(patches.astype(jnp.bfloat16), w2_ref[...],
                 preferred_element_type=jnp.float32)
    h2 = jnp.maximum(h2 + b2_ref[...], 0.0)                   # (H*W, P) f32

    # ---- stage 3: 1x1 conv + bias + residual + ReLU ----
    h3 = jnp.dot(h2.astype(jnp.bfloat16), w3_ref[...],
                 preferred_element_type=jnp.float32)
    h3 = h3 + b3_ref[...]                                     # (H*W, 4P)
    out_ref[0] = jnp.maximum(h3 + x2d, 0.0).astype(out_ref.dtype)


def fold_bn(gamma, beta, mean, var, eps=1e-5):
    scale = gamma / jnp.sqrt(var + eps)
    bias = beta - mean * scale
    return scale, bias.reshape(1, -1)


def bottleneck_forward(x_nchw, w1, w2, w3, bn1, bn2, bn3):
    """x_nchw: (N, Cin, H, W); w1: (Cin, P); w2: (3,3,P,P) HWIO; w3: (P, 4P)."""
    x = jnp.transpose(x_nchw, (0, 2, 3, 1)).astype(jnp.float32)   # NHWC
    N, H, W, Cin = x.shape
    P = w1.shape[1]
    Cout = 4 * P
    assert Cin == Cout, "default Bottleneck (downsample=None) needs inplanes == 4*planes"

    # Fold eval-mode BN into per-channel scale (into weights) + bias.
    s1, b1 = fold_bn(*bn1)
    s2, b2 = fold_bn(*bn2)
    s3, b3 = fold_bn(*bn3)

    w1f = (w1 * s1[None, :]).astype(jnp.bfloat16)                         # (Cin, P)
    w2f = (w2 * s2[None, None, None, :]).reshape(9 * P, P).astype(jnp.bfloat16)  # (9P, P)
    w3f = (w3 * s3[None, :]).astype(jnp.bfloat16)                         # (P, 4P)

    x2d = x.reshape(N, H * W, Cin)        # 2D-per-image layout for the kernel

    def full_spec(a):
        nd = a.ndim
        return pl.BlockSpec(a.shape, lambda n, _nd=nd: (0,) * _nd)

    weights = (w1f, b1, w2f, b2, w3f, b3)

    out = pl.pallas_call(
        bottleneck_kernel,
        out_shape=jax.ShapeDtypeStruct((N, H * W, Cout), jnp.float32),
        grid=(N,),
        in_specs=[pl.BlockSpec((1, H * W, Cin), lambda n: (n, 0, 0))]
                 + [full_spec(a) for a in weights],
        out_specs=pl.BlockSpec((1, H * W, Cout), lambda n: (n, 0, 0)),
        scratch_shapes=[pltpu.VMEM((H + 2, W + 2, P), jnp.float32)],
        compiler_params=pltpu.CompilerParams(
            dimension_semantics=("parallel",)),
    )(x2d, *weights)

    return jnp.transpose(out.reshape(N, H, W, Cout), (0, 3, 1, 2))  # NCHW


def bn_apply(x, gamma, beta, mean, var, eps=1e-5):
    return (x - mean) / jnp.sqrt(var + eps) * gamma + beta


def reference_forward(x_nchw, w1, w2, w3, bn1, bn2, bn3):
    """Pure-JAX NHWC reference matching the PyTorch module (eval-mode BN)."""
    x = jnp.transpose(x_nchw, (0, 2, 3, 1)).astype(jnp.float32)
    Cin, P = w1.shape
    dn = ('NHWC', 'HWIO', 'NHWC')
    h = lax.conv_general_dilated(x, w1.reshape(1, 1, Cin, P), (1, 1), 'VALID',
                                 dimension_numbers=dn)
    h = jnp.maximum(bn_apply(h, *bn1), 0.0)
    h = lax.conv_general_dilated(h, w2, (1, 1), ((1, 1), (1, 1)),
                                 dimension_numbers=dn)
    h = jnp.maximum(bn_apply(h, *bn2), 0.0)
    h = lax.conv_general_dilated(h, w3.reshape(1, 1, P, 4 * P), (1, 1), 'VALID',
                                 dimension_numbers=dn)
    h = bn_apply(h, *bn3)
    out = jnp.maximum(h + x, 0.0)
    return jnp.transpose(out, (0, 3, 1, 2))


if __name__ == "__main__":
    # Module config: planes=8, inplanes=planes*4=32 (default residual path).
    N, planes = 2, 8
    inplanes = planes * 4          # 32
    H = W = 16

    key = jax.random.PRNGKey(0)
    k = jax.random.split(key, 8)

    x = jax.random.normal(k[0], (N, inplanes, H, W), jnp.float32)       # NCHW input

    # conv weights (bias=False), stored directly in matmul-friendly layouts.
    w1 = jax.random.normal(k[1], (inplanes, planes), jnp.float32) * 0.1     # 1x1
    w2 = jax.random.normal(k[2], (3, 3, planes, planes), jnp.float32) * 0.1 # 3x3 HWIO
    w3 = jax.random.normal(k[3], (planes, 4 * planes), jnp.float32) * 0.1   # 1x1

    # BatchNorm params (eval-mode): gamma, beta, running_mean, running_var.
    def bn_params(kk, c):
        kg, kb, km, kv = jax.random.split(kk, 4)
        gamma = 1.0 + 0.1 * jax.random.normal(kg, (c,), jnp.float32)
        beta = 0.1 * jax.random.normal(kb, (c,), jnp.float32)
        mean = 0.1 * jax.random.normal(km, (c,), jnp.float32)
        var = 0.5 + jax.random.uniform(kv, (c,), jnp.float32)
        return (gamma, beta, mean, var)

    bn1 = bn_params(k[4], planes)
    bn2 = bn_params(k[5], planes)
    bn3 = bn_params(k[6], 4 * planes)

    out = bottleneck_forward(x, w1, w2, w3, bn1, bn2, bn3)
    out = jax.block_until_ready(out)

    ref = reference_forward(x, w1, w2, w3, bn1, bn2, bn3)
    ref = jax.block_until_ready(ref)

    # bf16 matmul operands (f32 accumulation) => looser tolerance than pure f32.
    np.testing.assert_allclose(np.asarray(out), np.asarray(ref),
                               rtol=2e-2, atol=2e-2)
    print("KERNEL_OK")
</pallas_src>

<mosaic_0001>
module attributes {stable_mosaic.version = 11 : i64} {
  func.func @bottleneck_kernel(%arg0: i32, %arg1: memref<1x256x32xf32, #tpu.memory_space<vmem>>, %arg2: memref<32x8xbf16, #tpu.memory_space<vmem>>, %arg3: memref<1x8xf32, #tpu.memory_space<vmem>>, %arg4: memref<72x8xbf16, #tpu.memory_space<vmem>>, %arg5: memref<1x8xf32, #tpu.memory_space<vmem>>, %arg6: memref<8x32xbf16, #tpu.memory_space<vmem>>, %arg7: memref<1x32xf32, #tpu.memory_space<vmem>>, %arg8: memref<1x256x32xf32, #tpu.memory_space<vmem>>, %arg9: memref<18x18x8xf32, #tpu.memory_space<vmem>>) attributes {dimension_semantics = [#tpu.dimension_semantics<parallel>], iteration_bounds = array<i64: 2>, scalar_prefetch = 0 : i64, scratch_operands = 1 : i64, tpu.core_type = #tpu.core_type<tc>, window_params = [{transform_indices = @transform_0, window_bounds = array<i64: 1, 256, 32>}, {pipeline_mode = #tpu.pipeline_mode<synchronous>, transform_indices = @transform_1, window_bounds = array<i64: 32, 8>}, {pipeline_mode = #tpu.pipeline_mode<synchronous>, transform_indices = @transform_2, window_bounds = array<i64: 1, 8>}, {pipeline_mode = #tpu.pipeline_mode<synchronous>, transform_indices = @transform_3, window_bounds = array<i64: 72, 8>}, {pipeline_mode = #tpu.pipeline_mode<synchronous>, transform_indices = @transform_4, window_bounds = array<i64: 1, 8>}, {pipeline_mode = #tpu.pipeline_mode<synchronous>, transform_indices = @transform_5, window_bounds = array<i64: 8, 32>}, {pipeline_mode = #tpu.pipeline_mode<synchronous>, transform_indices = @transform_6, window_bounds = array<i64: 1, 32>}, {transform_indices = @transform_7, window_bounds = array<i64: 1, 256, 32>}]} {
    %c0 = arith.constant 0 : index
    %c0_0 = arith.constant 0 : index
    %c0_1 = arith.constant 0 : index
    %0 = vector.load %arg1[%c0, %c0_0, %c0_1] : memref<1x256x32xf32, #tpu.memory_space<vmem>>, vector<1x256x32xf32>
    %1 = vector.shape_cast %0 : vector<1x256x32xf32> to vector<256x32xf32>
    %2 = arith.truncf %1 : vector<256x32xf32> to vector<256x32xbf16>
    %c0_2 = arith.constant 0 : index
    %c0_3 = arith.constant 0 : index
    %3 = vector.load %arg2[%c0_2, %c0_3] : memref<32x8xbf16, #tpu.memory_space<vmem>>, vector<32x8xbf16>
    %cst = arith.constant dense<0.000000e+00> : vector<256x8xf32>
    %4 = tpu.matmul %2, %3, %cst {dimension_numbers = #tpu.dot_dimension_numbers<[1], [0], [0], [1], [0, 0, 1, 1], [], []>} : vector<256x32xbf16>, vector<32x8xbf16>, vector<256x8xf32> -> vector<256x8xf32>
    %c0_4 = arith.constant 0 : index
    %c0_5 = arith.constant 0 : index
    %5 = vector.load %arg3[%c0_4, %c0_5] : memref<1x8xf32, #tpu.memory_space<vmem>>, vector<1x8xf32>
    %6 = vector.broadcast %5 : vector<1x8xf32> to vector<256x8xf32>
    %7 = arith.addf %4, %6 : vector<256x8xf32>
    %cst_6 = arith.constant 0.000000e+00 : f32
    %8 = vector.broadcast %cst_6 : f32 to vector<256x8xf32>
    %9 = arith.maximumf %7, %8 : vector<256x8xf32>
    %cst_7 = arith.constant 0.000000e+00 : f32
    %10 = vector.broadcast %cst_7 : f32 to vector<18x18x8xf32>
    %c0_8 = arith.constant 0 : index
    %c0_9 = arith.constant 0 : index
    %c0_10 = arith.constant 0 : index
    %11 = vector.load %arg9[%c0_8, %c0_9, %c0_10] : memref<18x18x8xf32, #tpu.memory_space<vmem>>, vector<18x18x8xf32>
    tpu.vector_store %arg9[%c0_8, %c0_9, %c0_10], %10 {strides = array<i32>} : memref<18x18x8xf32, #tpu.memory_space<vmem>>, vector<18x18x8xf32>,
    %12 = vector.shape_cast %9 : vector<256x8xf32> to vector<16x16x8xf32>
    %c1 = arith.constant 1 : index
    %c1_11 = arith.constant 1 : index
    %c0_12 = arith.constant 0 : index
    %13 = vector.load %arg9[%c1, %c1_11, %c0_12] : memref<18x18x8xf32, #tpu.memory_space<vmem>>, vector<16x16x8xf32>
    tpu.vector_store %arg9[%c1, %c1_11, %c0_12], %12 {strides = array<i32>} : memref<18x18x8xf32, #tpu.memory_space<vmem>>, vector<16x16x8xf32>,
    %c0_13 = arith.constant 0 : index
    %c0_14 = arith.constant 0 : index
    %c0_15 = arith.constant 0 : index
    %14 = vector.load %arg9[%c0_13, %c0_14, %c0_15] : memref<18x18x8xf32, #tpu.memory_space<vmem>>, vector<16x16x8xf32>
    %15 = vector.shape_cast %14 : vector<16x16x8xf32> to vector<256x8xf32>
    %c0_16 = arith.constant 0 : index
    %c1_17 = arith.constant 1 : index
    %c0_18 = arith.constant 0 : index
    %16 = vector.load %arg9[%c0_16, %c1_17, %c0_18] : memref<18x18x8xf32, #tpu.memory_space<vmem>>, vector<16x16x8xf32>
    %17 = vector.shape_cast %16 : vector<16x16x8xf32> to vector<256x8xf32>
    %c0_19 = arith.constant 0 : index
    %c2 = arith.constant 2 : index
    %c0_20 = arith.constant 0 : index
    %18 = vector.load %arg9[%c0_19, %c2, %c0_20] : memref<18x18x8xf32, #tpu.memory_space<vmem>>, vector<16x16x8xf32>
    %19 = vector.shape_cast %18 : vector<16x16x8xf32> to vector<256x8xf32>
    %c1_21 = arith.constant 1 : index
    %c0_22 = arith.constant 0 : index
    %c0_23 = arith.constant 0 : index
    %20 = vector.load %arg9[%c1_21, %c0_22, %c0_23] : memref<18x18x8xf32, #tpu.memory_space<vmem>>, vector<16x16x8xf32>
    %21 = vector.shape_cast %20 : vector<16x16x8xf32> to vector<256x8xf32>
    %c1_24 = arith.constant 1 : index
    %c1_25 = arith.constant 1 : index
    %c0_26 = arith.constant 0 : index
    %22 = vector.load %arg9[%c1_24, %c1_25, %c0_26] : memref<18x18x8xf32, #tpu.memory_space<vmem>>, vector<16x16x8xf32>
    %23 = vector.shape_cast %22 : vector<16x16x8xf32> to vector<256x8xf32>
    %c1_27 = arith.constant 1 : index
    %c2_28 = arith.constant 2 : index
    %c0_29 = arith.constant 0 : index
    %24 = vector.load %arg9[%c1_27, %c2_28, %c0_29] : memref<18x18x8xf32, #tpu.memory_space<vmem>>, vector<16x16x8xf32>
    %25 = vector.shape_cast %24 : vector<16x16x8xf32> to vector<256x8xf32>
    %c2_30 = arith.constant 2 : index
    %c0_31 = arith.constant 0 : index
    %c0_32 = arith.constant 0 : index
    %26 = vector.load %arg9[%c2_30, %c0_31, %c0_32] : memref<18x18x8xf32, #tpu.memory_space<vmem>>, vector<16x16x8xf32>
    %27 = vector.shape_cast %26 : vector<16x16x8xf32> to vector<256x8xf32>
    %c2_33 = arith.constant 2 : index
    %c1_34 = arith.constant 1 : index
    %c0_35 = arith.constant 0 : index
    %28 = vector.load %arg9[%c2_33, %c1_34, %c0_35] : memref<18x18x8xf32, #tpu.memory_space<vmem>>, vector<16x16x8xf32>
    %29 = vector.shape_cast %28 : vector<16x16x8xf32> to vector<256x8xf32>
    %c2_36 = arith.constant 2 : index
    %c2_37 = arith.constant 2 : index
    %c0_38 = arith.constant 0 : index
    %30 = vector.load %arg9[%c2_36, %c2_37, %c0_38] : memref<18x18x8xf32, #tpu.memory_space<vmem>>, vector<16x16x8xf32>
    %31 = vector.shape_cast %30 : vector<16x16x8xf32> to vector<256x8xf32>
    %32 = tpu.concatenate %15, %17, %19, %21, %23, %25, %27, %29, %31 in 1 : vector<256x8xf32>, vector<256x8xf32>, vector<256x8xf32>, vector<256x8xf32>, vector<256x8xf32>, vector<256x8xf32>, vector<256x8xf32>, vector<256x8xf32>, vector<256x8xf32> -> vector<256x72xf32>
    %33 = arith.truncf %32 : vector<256x72xf32> to vector<256x72xbf16>
    %c0_39 = arith.constant 0 : index
    %c0_40 = arith.constant 0 : index
    %34 = vector.load %arg4[%c0_39, %c0_40] : memref<72x8xbf16, #tpu.memory_space<vmem>>, vector<72x8xbf16>
    %cst_41 = arith.constant dense<0.000000e+00> : vector<256x8xf32>
    %35 = tpu.matmul %33, %34, %cst_41 {dimension_numbers = #tpu.dot_dimension_numbers<[1], [0], [0], [1], [0, 0, 1, 1], [], []>} : vector<256x72xbf16>, vector<72x8xbf16>, vector<256x8xf32> -> vector<256x8xf32>
    %c0_42 = arith.constant 0 : index
    %c0_43 = arith.constant 0 : index
    %36 = vector.load %arg5[%c0_42, %c0_43] : memref<1x8xf32, #tpu.memory_space<vmem>>, vector<1x8xf32>
    %37 = vector.broadcast %36 : vector<1x8xf32> to vector<256x8xf32>
    %38 = arith.addf %35, %37 : vector<256x8xf32>
    %cst_44 = arith.constant 0.000000e+00 : f32
    %39 = vector.broadcast %cst_44 : f32 to vector<256x8xf32>
    %40 = arith.maximumf %38, %39 : vector<256x8xf32>
    %41 = arith.truncf %40 : vector<256x8xf32> to vector<256x8xbf16>
    %c0_45 = arith.constant 0 : index
    %c0_46 = arith.constant 0 : index
    %42 = vector.load %arg6[%c0_45, %c0_46] : memref<8x32xbf16, #tpu.memory_space<vmem>>, vector<8x32xbf16>
    %cst_47 = arith.constant dense<0.000000e+00> : vector<256x32xf32>
    %43 = tpu.matmul %41, %42, %cst_47 {dimension_numbers = #tpu.dot_dimension_numbers<[1], [0], [0], [1], [0, 0, 1, 1], [], []>} : vector<256x8xbf16>, vector<8x32xbf16>, vector<256x32xf32> -> vector<256x32xf32>
    %c0_48 = arith.constant 0 : index
    %c0_49 = arith.constant 0 : index
    %44 = vector.load %arg7[%c0_48, %c0_49] : memref<1x32xf32, #tpu.memory_space<vmem>>, vector<1x32xf32>
    %45 = vector.broadcast %44 : vector<1x32xf32> to vector<256x32xf32>
    %46 = arith.addf %43, %45 : vector<256x32xf32>
    %47 = arith.addf %46, %1 : vector<256x32xf32>
    %cst_50 = arith.constant 0.000000e+00 : f32
    %48 = vector.broadcast %cst_50 : f32 to vector<256x32xf32>
    %49 = arith.maximumf %47, %48 : vector<256x32xf32>
    %c0_51 = arith.constant 0 : index
    %c0_52 = arith.constant 0 : index
    %c0_53 = arith.constant 0 : index
    %50 = vector.load %arg8[%c0_51, %c0_52, %c0_53] : memref<1x256x32xf32, #tpu.memory_space<vmem>>, vector<1x256x32xf32>
    %51 = vector.shape_cast %50 : vector<1x256x32xf32> to vector<256x32xf32>
    %52 = vector.shape_cast %49 : vector<256x32xf32> to vector<1x256x32xf32>
    tpu.vector_store %arg8[%c0_51, %c0_52, %c0_53], %52 {strides = array<i32>} : memref<1x256x32xf32, #tpu.memory_space<vmem>>, vector<1x256x32xf32>,
    return
  }
  func.func @transform_0(%arg0: i32) -> (i32, i32, i32) {
    %c0_i32 = arith.constant 0 : i32
    %c0_i32_0 = arith.constant 0 : i32
    %c0_i32_1 = arith.constant 0 : i32
    return %arg0, %c0_i32, %c0_i32_0 : i32, i32, i32
  }
  func.func @transform_1(%arg0: i32) -> (i32, i32) {
    %c0_i32 = arith.constant 0 : i32
    %c0_i32_0 = arith.constant 0 : i32
    %c0_i32_1 = arith.constant 0 : i32
    return %c0_i32, %c0_i32_0 : i32, i32
  }
  func.func @transform_2(%arg0: i32) -> (i32, i32) {
    %c0_i32 = arith.constant 0 : i32
    %c0_i32_0 = arith.constant 0 : i32
    %c0_i32_1 = arith.constant 0 : i32
    return %c0_i32, %c0_i32_0 : i32, i32
  }
  func.func @transform_3(%arg0: i32) -> (i32, i32) {
    %c0_i32 = arith.constant 0 : i32
    %c0_i32_0 = arith.constant 0 : i32
    %c0_i32_1 = arith.constant 0 : i32
    return %c0_i32, %c0_i32_0 : i32, i32
  }
  func.func @transform_4(%arg0: i32) -> (i32, i32) {
    %c0_i32 = arith.constant 0 : i32
    %c0_i32_0 = arith.constant 0 : i32
    %c0_i32_1 = arith.constant 0 : i32
    return %c0_i32, %c0_i32_0 : i32, i32
  }
  func.func @transform_5(%arg0: i32) -> (i32, i32) {
    %c0_i32 = arith.constant 0 : i32
    %c0_i32_0 = arith.constant 0 : i32
    %c0_i32_1 = arith.constant 0 : i32
    return %c0_i32, %c0_i32_0 : i32, i32
  }
  func.func @transform_6(%arg0: i32) -> (i32, i32) {
    %c0_i32 = arith.constant 0 : i32
    %c0_i32_0 = arith.constant 0 : i32
    %c0_i32_1 = arith.constant 0 : i32
    return %c0_i32, %c0_i32_0 : i32, i32
  }
  func.func @transform_7(%arg0: i32) -> (i32, i32, i32) {
    %c0_i32 = arith.constant 0 : i32
    %c0_i32_0 = arith.constant 0 : i32
    %c0_i32_1 = arith.constant 0 : i32
    return %arg0, %c0_i32, %c0_i32_0 : i32, i32, i32
  }
}

</mosaic_0001>

<llo_original>
// kernel: tpu_custom_call.1
$region0: #{tpu_custom_call.1}
  #allocation0 [shape = 'u32[]', space=smem, size = 0x4, offset = 0x4, fixed_abs, tag = 'smem constant byte address 0x4 - core index']
  #allocation1 [shape = 'u32[144,128]{1,0:T(1,128)}', space=vmem, size = 0x12000, scoped, tag = 'internal scratch']
  #allocation2 [shape = 'f32[18,18,8]{2,1,0:T(8,128)}', space=vmem, size = 0x36000, scoped, tag = 'scratch operand']
  %s0 = inlined_call_operand.vmem [shape: f32[2,256,32], index: 0, kind: input, shape index: {}]
  %s1 = inlined_call_operand.vmem [shape: bf16[32,8], index: 1, kind: input, shape index: {}]
  %s2 = inlined_call_operand.vmem [shape: f32[1,8], index: 2, kind: input, shape index: {}]
  %s3 = inlined_call_operand.vmem [shape: bf16[72,8], index: 3, kind: input, shape index: {}]
  %s4 = inlined_call_operand.vmem [shape: f32[1,8], index: 4, kind: input, shape index: {}]
  %s5 = inlined_call_operand.vmem [shape: bf16[8,32], index: 5, kind: input, shape index: {}]
  %s6 = inlined_call_operand.vmem [shape: f32[1,32], index: 6, kind: input, shape index: {}]
  %s7 = inlined_call_operand.vmem [shape: f32[2,256,32], index: 7, kind: output, shape index: {}]
  %s8 = sld [smem:[#allocation0]]
  $region61: #{tpu_custom_call.1} parent=0
    _
  %s10 = ssub.s32 1, %s8
  %s11 = scalar_select 0, %s10, %s8
  loop: start=0, step=1, limit=4
  $region2: #{tpu_custom_call.1} parent=0 // loop_pre_header
    _
  $region3: #{tpu_custom_call.1} parent=0 // loop_header
    %s13 = sphi 0, %s17
    %p14 = scmp.ge.s32.totalorder %s13, 4
    %s23 = sphi 0, %s25
    %s26 = sphi 0, %s23
    %s27 = sphi 0, %s26
    %s43 = sphi 0, %s27
    %s47 = sphi 0, %s47
    %s49 = sphi 0, %s47
    %s50 = sphi 0, %s49
    %s64 = sphi 0, %s50
    %s68 = sphi 0, %s68
    %s70 = sphi 0, %s68
    %s71 = sphi 0, %s70
    %s85 = sphi 0, %s71
    %s89 = sphi 0, %s89
    %s91 = sphi 0, %s89
    %s92 = sphi 0, %s91
    %s106 = sphi 0, %s92
    %s110 = sphi 0, %s110
    %s112 = sphi 0, %s110
    %s113 = sphi 0, %s112
    %s127 = sphi 0, %s113
    %s131 = sphi 0, %s131
    %s133 = sphi 0, %s131
    %s134 = sphi 0, %s133
    %s148 = sphi 0, %s134
    %s152 = sphi 0, %s152
    %s154 = sphi 0, %s152
    %s155 = sphi 0, %s154
    %s169 = sphi 0, %s155
    %s175 = sphi 0, %s177
    %s178 = sphi 0, %s175
    %s179 = sphi 0, %s178
    %s195 = sphi 0, %s179
  $region4: #{tpu_custom_call.1} parent=0 // loop_header_branch
    %16 = sbr.rel (%p14) target = $region8
  $region5: #{tpu_custom_call.1} parent=0 // loop_body
    %s18 = ssub.s32 %s13, 1
    %s19 = ssub.s32 %s13, 2
    %s20 = sadd.s32 %s13, 1
    %s21 = ssub.s32 %s13, %s20
    %p22 = scmp.eq.s32.totalorder %s21, 0
    %s24 = sadd.s32 %s23, 1
    %s25 = scalar_select %p22, %s23, %s24
    %p28 = pneg %p22
    %p29 = scmp.eq.s32.totalorder %s13, 1
    %p30 = por %p28, %p29
    %p31 = scmp.ne.s32.totalorder %s23, %s26
    %p32 = scmp.eq.s32.totalorder %s13, 0
    %p33 = por %p31, %p32
    %p34 = scmp.ne.s32.totalorder %s23, %s26
    %p35 = scmp.eq.s32.totalorder %s18, 1
    %p36 = por %p34, %p35
    %p37 = scmp.ne.s32.totalorder %s26, %s27
    %p38 = scmp.eq.s32.totalorder %s18, 0
    %p39 = por %p37, %p38
    %p40 = scmp.ne.s32.totalorder %s26, %s27
    %p41 = scmp.eq.s32.totalorder %s19, 1
    %p42 = por %p40, %p41
    %p44 = scmp.ne.s32.totalorder %s27, %s43
    %p45 = scmp.eq.s32.totalorder %s19, 0
    %p46 = por %p44, %p45
    %s48 = sadd.s32 %s47, 1
    %p51 = scmp.eq.s32.totalorder %s13, 1
    %p52 = scmp.ne.s32.totalorder %s47, %s49
    %p53 = scmp.eq.s32.totalorder %s13, 0
    %p54 = por %p52, %p53
    %p55 = scmp.ne.s32.totalorder %s47, %s49
    %p56 = scmp.eq.s32.totalorder %s18, 1
    %p57 = por %p55, %p56
    %p58 = scmp.ne.s32.totalorder %s49, %s50
    %p59 = scmp.eq.s32.totalorder %s18, 0
    %p60 = por %p58, %p59
    %p61 = scmp.ne.s32.totalorder %s49, %s50
    %p62 = scmp.eq.s32.totalorder %s19, 1
    %p63 = por %p61, %p62
    %p65 = scmp.ne.s32.totalorder %s50, %s64
    %p66 = scmp.eq.s32.totalorder %s19, 0
    %p67 = por %p65, %p66
    %s69 = sadd.s32 %s68, 1
    %p72 = scmp.eq.s32.totalorder %s13, 1
    %p73 = scmp.ne.s32.totalorder %s68, %s70
    %p74 = scmp.eq.s32.totalorder %s13, 0
    %p75 = por %p73, %p74
    %p76 = scmp.ne.s32.totalorder %s68, %s70
    %p77 = scmp.eq.s32.totalorder %s18, 1
    %p78 = por %p76, %p77
    %p79 = scmp.ne.s32.totalorder %s70, %s71
    %p80 = scmp.eq.s32.totalorder %s18, 0
    %p81 = por %p79, %p80
    %p82 = scmp.ne.s32.totalorder %s70, %s71
    %p83 = scmp.eq.s32.totalorder %s19, 1
    %p84 = por %p82, %p83
    %p86 = scmp.ne.s32.totalorder %s71, %s85
    %p87 = scmp.eq.s32.totalorder %s19, 0
    %p88 = por %p86, %p87
    %s90 = sadd.s32 %s89, 1
    %p93 = scmp.eq.s32.totalorder %s13, 1
    %p94 = scmp.ne.s32.totalorder %s89, %s91
    %p95 = scmp.eq.s32.totalorder %s13, 0
    %p96 = por %p94, %p95
    %p97 = scmp.ne.s32.totalorder %s89, %s91
    %p98 = scmp.eq.s32.totalorder %s18, 1
    %p99 = por %p97, %p98
    %p100 = scmp.ne.s32.totalorder %s91, %s92
    %p101 = scmp.eq.s32.totalorder %s18, 0
    %p102 = por %p100, %p101
    %p103 = scmp.ne.s32.totalorder %s91, %s92
    %p104 = scmp.eq.s32.totalorder %s19, 1
    %p105 = por %p103, %p104
    %p107 = scmp.ne.s32.totalorder %s92, %s106
    %p108 = scmp.eq.s32.totalorder %s19, 0
    %p109 = por %p107, %p108
    %s111 = sadd.s32 %s110, 1
    %p114 = scmp.eq.s32.totalorder %s13, 1
    %p115 = scmp.ne.s32.totalorder %s110, %s112
    %p116 = scmp.eq.s32.totalorder %s13, 0
    %p117 = por %p115, %p116
    %p118 = scmp.ne.s32.totalorder %s110, %s112
    %p119 = scmp.eq.s32.totalorder %s18, 1
    %p120 = por %p118, %p119
    %p121 = scmp.ne.s32.totalorder %s112, %s113
    %p122 = scmp.eq.s32.totalorder %s18, 0
    %p123 = por %p121, %p122
    %p124 = scmp.ne.s32.totalorder %s112, %s113
    %p125 = scmp.eq.s32.totalorder %s19, 1
    %p126 = por %p124, %p125
    %p128 = scmp.ne.s32.totalorder %s113, %s127
    %p129 = scmp.eq.s32.totalorder %s19, 0
    %p130 = por %p128, %p129
    %s132 = sadd.s32 %s131, 1
    %p135 = scmp.eq.s32.totalorder %s13, 1
    %p136 = scmp.ne.s32.totalorder %s131, %s133
    %p137 = scmp.eq.s32.totalorder %s13, 0
    %p138 = por %p136, %p137
    %p139 = scmp.ne.s32.totalorder %s131, %s133
    %p140 = scmp.eq.s32.totalorder %s18, 1
    %p141 = por %p139, %p140
    %p142 = scmp.ne.s32.totalorder %s133, %s134
    %p143 = scmp.eq.s32.totalorder %s18, 0
    %p144 = por %p142, %p143
    %p145 = scmp.ne.s32.totalorder %s133, %s134
    %p146 = scmp.eq.s32.totalorder %s19, 1
    %p147 = por %p145, %p146
    %p149 = scmp.ne.s32.totalorder %s134, %s148
    %p150 = scmp.eq.s32.totalorder %s19, 0
    %p151 = por %p149, %p150
    %s153 = sadd.s32 %s152, 1
    %p156 = scmp.eq.s32.totalorder %s13, 1
    %p157 = scmp.ne.s32.totalorder %s152, %s154
    %p158 = scmp.eq.s32.totalorder %s13, 0
    %p159 = por %p157, %p158
    %p160 = scmp.ne.s32.totalorder %s152, %s154
    %p161 = scmp.eq.s32.totalorder %s18, 1
    %p162 = por %p160, %p161
    %p163 = scmp.ne.s32.totalorder %s154, %s155
    %p164 = scmp.eq.s32.totalorder %s18, 0
    %p165 = por %p163, %p164
    %p166 = scmp.ne.s32.totalorder %s154, %s155
    %p167 = scmp.eq.s32.totalorder %s19, 1
    %p168 = por %p166, %p167
    %p170 = scmp.ne.s32.totalorder %s155, %s169
    %p171 = scmp.eq.s32.totalorder %s19, 0
    %p172 = por %p170, %p171
    %s173 = ssub.s32 %s13, %s20
    %p174 = scmp.eq.s32.totalorder %s173, 0
    %s176 = sadd.s32 %s175, 1
    %s177 = scalar_select %p174, %s175, %s176
    %p180 = pneg %p174
    %p181 = scmp.eq.s32.totalorder %s13, 1
    %p182 = por %p180, %p181
    %p183 = scmp.ne.s32.totalorder %s175, %s178
    %p184 = scmp.eq.s32.totalorder %s13, 0
    %p185 = por %p183, %p184
    %p186 = scmp.ne.s32.totalorder %s175, %s178
    %p187 = scmp.eq.s32.totalorder %s18, 1
    %p188 = por %p186, %p187
    %p189 = scmp.ne.s32.totalorder %s178, %s179
    %p190 = scmp.eq.s32.totalorder %s18, 0
    %p191 = por %p189, %p190
    %p192 = scmp.ne.s32.totalorder %s178, %s179
    %p193 = scmp.eq.s32.totalorder %s19, 1
    %p194 = por %p192, %p193
    %p196 = scmp.ne.s32.totalorder %s179, %s195
    %p197 = scmp.eq.s32.totalorder %s19, 0
    %p198 = por %p196, %p197
    %p199 = scmp.le.s32.totalorder 1, %s13
    %p200 = scmp.lt.s32.totalorder %s13, 3
    %p201 = pnand %p199, %p200
    %p202 = pneg %p201
    // Predicated region
    $region9: #{tpu_custom_call.1} parent=5 // pred_check
      _
    $region10: #{tpu_custom_call.1} parent=5 // pred_check_branch
      %204 = sbr.rel (%p201) target = $region12
    $region11: #{tpu_custom_call.1} parent=5 // pred_region
      %s205 = ssub.s32 %s13, 1
      // Predicated region
      $region13: #{tpu_custom_call.1} parent=11 // pred_check
        %p206 = pneg %p60
      $region14: #{tpu_custom_call.1} parent=11 // pred_check_branch
        %208 = sbr.rel (%p206) target = $region16
      $region15: #{tpu_custom_call.1} parent=11 // pred_region
        _
      $region16: #{tpu_custom_call.1} parent=11 // pred_fallthru
        _
      // Predicated region
      $region17: #{tpu_custom_call.1} parent=11 // pred_check
        %p209 = pneg %p81
      $region18: #{tpu_custom_call.1} parent=11 // pred_check_branch
        %211 = sbr.rel (%p209) target = $region20
      $region19: #{tpu_custom_call.1} parent=11 // pred_region
        _
      $region20: #{tpu_custom_call.1} parent=11 // pred_fallthru
        _
      // Predicated region
      $region21: #{tpu_custom_call.1} parent=11 // pred_check
        %p212 = pneg %p102
      $region22: #{tpu_custom_call.1} parent=11 // pred_check_branch
        %214 = sbr.rel (%p212) target = $region24
      $region23: #{tpu_custom_call.1} parent=11 // pred_region
        _
      $region24: #{tpu_custom_call.1} parent=11 // pred_fallthru
        _
      // Predicated region
      $region25: #{tpu_custom_call.1} parent=11 // pred_check
        %p215 = pneg %p123
      $region26: #{tpu_custom_call.1} parent=11 // pred_check_branch
        %217 = sbr.rel (%p215) target = $region28
      $region27: #{tpu_custom_call.1} parent=11 // pred_region
        _
      $region28: #{tpu_custom_call.1} parent=11 // pred_fallthru
        _
      // Predicated region
      $region29: #{tpu_custom_call.1} parent=11 // pred_check
        %p218 = pneg %p144
      $region30: #{tpu_custom_call.1} parent=11 // pred_check_branch
        %220 = sbr.rel (%p218) target = $region32
      $region31: #{tpu_custom_call.1} parent=11 // pred_region
        _
      $region32: #{tpu_custom_call.1} parent=11 // pred_fallthru
        _
      // Predicated region
      $region33: #{tpu_custom_call.1} parent=11 // pred_check
        %p221 = pneg %p165
      $region34: #{tpu_custom_call.1} parent=11 // pred_check_branch
        %223 = sbr.rel (%p221) target = $region36
      $region35: #{tpu_custom_call.1} parent=11 // pred_region
        _
      $region36: #{tpu_custom_call.1} parent=11 // pred_fallthru
        _
    $region12: #{tpu_custom_call.1} parent=5 // pred_fallthru
      _
    %p224 = scmp.lt.s32.totalorder %s13, 2
    // Predicated region
    $region37: #{tpu_custom_call.1} parent=5 // pred_check
      %p225 = pneg %p224
    $region38: #{tpu_custom_call.1} parent=5 // pred_check_branch
      %227 = sbr.rel (%p225) target = $region40
    $region39: #{tpu_custom_call.1} parent=5 // pred_region
      // Predicated region
      $region41: #{tpu_custom_call.1} parent=39 // pred_check
        %p228 = pneg %p33
      $region42: #{tpu_custom_call.1} parent=39 // pred_check_branch
        %230 = sbr.rel (%p228) target = $region44
      $region43: #{tpu_custom_call.1} parent=39 // pred_region
        %p231 = scmp.lt.s32.totalorder %s13, 1
        %s232 = scalar_select %p231, %s13, 1
        %s233 = smul.addr %s232, 32
        %s234 = smul.addr %s233, 8
        %s235 = scalar_lea.vmem %s0, %s234
      $region44: #{tpu_custom_call.1} parent=39 // pred_fallthru
        _
    $region40: #{tpu_custom_call.1} parent=5 // pred_fallthru
      _
    %p236 = scmp.le.s32.totalorder 1, %s13
    %p237 = scmp.lt.s32.totalorder %s13, 3
    %p238 = pnand %p236, %p237
    %p239 = pneg %p238
    // Predicated region
    $region45: #{tpu_custom_call.1} parent=5 // pred_check
      _
    $region46: #{tpu_custom_call.1} parent=5 // pred_check_branch
      %241 = sbr.rel (%p238) target = $region48
    $region47: #{tpu_custom_call.1} parent=5 // pred_region
      %s242 = ssub.s32 %s13, 1
      %p243 = scmp.lt.s32.totalorder %s18, 1
      %s244 = scalar_select %p243, %s18, 1
      %s245 = smul.addr %s244, 32
      %s246 = smul.addr %s245, 8
      %s247 = scalar_lea.vmem %s0, %s246
      %p248 = pneg %p39
      %p249 = pneg %p36
      %p250 = pneg %p60
      %p251 = pneg %p57
      %p252 = pneg %p81
      %p253 = pneg %p78
      %p254 = pneg %p102
      %p255 = pneg %p99
      %p256 = pneg %p123
      %p257 = pneg %p120
      %p258 = pneg %p144
      %p259 = pneg %p141
      %p260 = pneg %p165
      %p261 = pneg %p162
      %p262 = pneg %p191
      %p263 = pneg %p188
      %p264 = scmp.lt.s32.totalorder %s18, 1
      %s265 = scalar_select %p264, %s18, 1
      %s266 = smul.addr %s265, 32
      %s267 = smul.addr %s266, 8
      %s268 = scalar_lea.vmem %s7, %s267
      %p269 = scmp.lt.s32.totalorder %s18, 1
      %s270 = scalar_select %p269, %s18, 1
      %s271 = smul.addr %s270, 32
      %s272 = smul.addr %s271, 8
      %s273 = scalar_lea.vmem %s0, %s272
      %p274 = scmp.lt.s32.totalorder %s18, 1
      %s275 = scalar_select %p274, %s18, 1
      %s276 = smul.addr %s275, 32
      %s277 = smul.addr %s276, 8
      %s278 = scalar_lea.vmem %s7, %s277
      %v280 = vld [vmem:[%s273] sm:$0xff]
      %v281 = vld [vmem:[%s273 + $0x8] sm:$0xff]
      %v282 = vld [vmem:[%s273 + $0x10] sm:$0xff]
      %v283 = vld [vmem:[%s273 + $0x18] sm:$0xff]
      %v284 = vld [vmem:[%s273 + $0x20] sm:$0xff]
      %v285 = vld [vmem:[%s273 + $0x28] sm:$0xff]
      %v286 = vld [vmem:[%s273 + $0x30] sm:$0xff]
      %v287 = vld [vmem:[%s273 + $0x38] sm:$0xff]
      %v288 = vld [vmem:[%s273 + $0x40] sm:$0xff]
      %v289 = vld [vmem:[%s273 + $0x48] sm:$0xff]
      %v290 = vld [vmem:[%s273 + $0x50] sm:$0xff]
      %v291 = vld [vmem:[%s273 + $0x58] sm:$0xff]
      %v292 = vld [vmem:[%s273 + $0x60] sm:$0xff]
      %v293 = vld [vmem:[%s273 + $0x68] sm:$0xff]
      %v294 = vld [vmem:[%s273 + $0x70] sm:$0xff]
      %v295 = vld [vmem:[%s273 + $0x78] sm:$0xff]
      %v296 = vld [vmem:[%s273 + $0x80] sm:$0xff]
      %v297 = vld [vmem:[%s273 + $0x88] sm:$0xff]
      %v298 = vld [vmem:[%s273 + $0x90] sm:$0xff]
      %v299 = vld [vmem:[%s273 + $0x98] sm:$0xff]
      %v300 = vld [vmem:[%s273 + $0xa0] sm:$0xff]
      %v301 = vld [vmem:[%s273 + $0xa8] sm:$0xff]
      %v302 = vld [vmem:[%s273 + $0xb0] sm:$0xff]
      %v303 = vld [vmem:[%s273 + $0xb8] sm:$0xff]
      %v304 = vld [vmem:[%s273 + $0xc0] sm:$0xff]
      %v305 = vld [vmem:[%s273 + $0xc8] sm:$0xff]
      %v306 = vld [vmem:[%s273 + $0xd0] sm:$0xff]
      %v307 = vld [vmem:[%s273 + $0xd8] sm:$0xff]
      %v308 = vld [vmem:[%s273 + $0xe0] sm:$0xff]
      %v309 = vld [vmem:[%s273 + $0xe8] sm:$0xff]
      %v310 = vld [vmem:[%s273 + $0xf0] sm:$0xff]
      %v311 = vld [vmem:[%s273 + $0xf8] sm:$0xff]
      %v312 = vpack.c.bf16 %v281, %v280
      %v313 = vpack.c.bf16 %v283, %v282
      %v314 = vpack.c.bf16 %v285, %v284
      %v315 = vpack.c.bf16 %v287, %v286
      %v316 = vpack.c.bf16 %v289, %v288
      %v317 = vpack.c.bf16 %v291, %v290
      %v318 = vpack.c.bf16 %v293, %v292
      %v319 = vpack.c.bf16 %v295, %v294
      %v320 = vpack.c.bf16 %v297, %v296
      %v321 = vpack.c.bf16 %v299, %v298
      %v322 = vpack.c.bf16 %v301, %v300
      %v323 = vpack.c.bf16 %v303, %v302
      %v324 = vpack.c.bf16 %v305, %v304
      %v325 = vpack.c.bf16 %v307, %v306
      %v326 = vpack.c.bf16 %v309, %v308
      %v327 = vpack.c.bf16 %v311, %v310
      %v328 = vld [vmem:[%s1] sm:$0xf]
      %v329 = vld [vmem:[%s1 + $0x4] sm:$0xf]
      %v330 = vld [vmem:[%s1 + $0x8] sm:$0xf]
      %v331 = vld [vmem:[%s1 + $0xc] sm:$0xf]
      %v332 = vld [vmem:[%s2] sm:$0x1]
      %v334 = vlaneseq
      %v335 = vshrl.u32 %v334, 7
      %v336 = vsub.s32 0, %v335
      %v337 = vrot.slane %v332, %v336
      %v343 = vunpack.c.l.b16 %v328
      %v344 = vunpack.c.l.b16 %v329
      %v345 = vunpack.c.l.b16 %v330
      %v346 = vunpack.c.l.b16 %v331
      %v347 = vpack.c.b16 %v344, %v343
      %v348 = vpack.c.b16 %v346, %v345
      %vm351 = vcmask 261120
      %v353 = vsel %vm351, %v312, 0
      %v356 = vsel %vm351, %v313, 0
      %v359 = vsel %vm351, %v314, 0
      %v362 = vsel %vm351, %v315, 0
      %v365 = vsel %vm351, %v316, 0
      %v368 = vsel %vm351, %v317, 0
      %v371 = vsel %vm351, %v318, 0
      %v374 = vsel %vm351, %v319, 0
      %v377 = vsel %vm351, %v320, 0
      %v380 = vsel %vm351, %v321, 0
      %v383 = vsel %vm351, %v322, 0
      %v386 = vsel %vm351, %v323, 0
      %v389 = vsel %vm351, %v324, 0
      %v392 = vsel %vm351, %v325, 0
      %v395 = vsel %vm351, %v326, 0
      %v398 = vsel %vm351, %v327, 0
      %400 = vmatprep.subr.bf16.mxu0 0
      %401 = vmatpush1.bf16.msra.mxu0 0
      %402 = vmatprep.subr.bf16.mxu0 0
      %403 = vmatpush1.bf16.msra.mxu0 0
      %404 = vmatprep.subr.bf16.mxu0 0
      %405 = vmatpush1.bf16.msra.mxu0 0
      %406 = vmatprep.subr.bf16.mxu0 0
      %407 = vmatpush1.bf16.msra.mxu0 0
      %408 = vmatprep.subr.bf16.mxu0 0
      %409 = vmatpush1.bf16.msra.mxu0 0
      %410 = vmatprep.subr.bf16.mxu0 0
      %411 = vmatpush1.bf16.msra.mxu0 0
      %412 = vmatprep.subr.bf16.mxu0 0
      %413 = vmatpush1.bf16.msra.mxu0 %v348
      %414 = vmatprep.subr.bf16.mxu0 0
      %415 = vmatpush1.bf16.msra.mxu0 %v347
      %416 = vmatprep.subr.bf16.mxu0 0
      %417 = vmatpush2.bf16.msra.mxu0 0
      %418 = vmatprep.subr.bf16.mxu0 0
      %419 = vmatpush2.bf16.msra.mxu0 0
      %420 = vmatprep.subr.bf16.mxu0 0
      %421 = vmatpush2.bf16.msra.mxu0 0
      %422 = vmatprep.subr.bf16.mxu0 0
      %423 = vmatpush2.bf16.msra.mxu0 0
      %424 = vmatprep.subr.bf16.mxu0 0
      %425 = vmatpush2.bf16.msra.mxu0 0
      %426 = vmatprep.subr.bf16.mxu0 0
      %427 = vmatpush2.bf16.msra.mxu0 0
      %428 = vmatprep.subr.bf16.mxu0 0
      %429 = vmatpush2.bf16.msra.mxu0 0
      %430 = vmatprep.subr.bf16.mxu0 0
      %431 = vmatpush2.bf16.msra.mxu0 0
      %432 = vmatprep.mubr.bf16.mxu0 0
      %433 = vmatmul.mubr.bf16.gmra.mxu0 %v353
      %v434 = vpop.f32.mrf.mxu0
      %v435 = vadd.f32 %v337, %v434
      %v436 = vpop.f32.mrf.mxu0
      %v437 = vpop.f32.mrf.mxu0
      %v438 = vadd.f32 %v337, %v437
      %v439 = vpop.f32.mrf.mxu0
      %440 = vmatprep.mubr.bf16.mxu0 0
      %441 = vmatmul.mubr.bf16.gmra.mxu0 %v356
      %v442 = vpop.f32.mrf.mxu0
      %v443 = vadd.f32 %v337, %v442
      %v444 = vpop.f32.mrf.mxu0
      %v445 = vpop.f32.mrf.mxu0
      %v446 = vadd.f32 %v337, %v445
      %v447 = vpop.f32.mrf.mxu0
      %448 = vmatprep.mubr.bf16.mxu0 0
      %449 = vmatmul.mubr.bf16.gmra.mxu0 %v359
      %v450 = vpop.f32.mrf.mxu0
      %v451 = vadd.f32 %v337, %v450
      %v452 = vpop.f32.mrf.mxu0
      %v453 = vpop.f32.mrf.mxu0
      %v454 = vadd.f32 %v337, %v453
      %v455 = vpop.f32.mrf.mxu0
      %456 = vmatprep.mubr.bf16.mxu0 0
      %457 = vmatmul.mubr.bf16.gmra.mxu0 %v362
      %v458 = vpop.f32.mrf.mxu0
      %v459 = vadd.f32 %v337, %v458
      %v460 = vpop.f32.mrf.mxu0
      %v461 = vpop.f32.mrf.mxu0
      %v462 = vadd.f32 %v337, %v461
      %v463 = vpop.f32.mrf.mxu0
      %464 = vmatprep.mubr.bf16.mxu0 0
      %465 = vmatmul.mubr.bf16.gmra.mxu0 %v365
      %v466 = vpop.f32.mrf.mxu0
      %v467 = vadd.f32 %v337, %v466
      %v468 = vpop.f32.mrf.mxu0
      %v469 = vpop.f32.mrf.mxu0
      %v470 = vadd.f32 %v337, %v469
      %v471 = vpop.f32.mrf.mxu0
      %472 = vmatprep.mubr.bf16.mxu0 0
      %473 = vmatmul.mubr.bf16.gmra.mxu0 %v368
      %v474 = vpop.f32.mrf.mxu0
      %v475 = vadd.f32 %v337, %v474
      %v476 = vpop.f32.mrf.mxu0
      %v477 = vpop.f32.mrf.mxu0
      %v478 = vadd.f32 %v337, %v477
      %v479 = vpop.f32.mrf.mxu0
      %480 = vmatprep.mubr.bf16.mxu0 0
      %481 = vmatmul.mubr.bf16.gmra.mxu0 %v371
      %v482 = vpop.f32.mrf.mxu0
      %v483 = vadd.f32 %v337, %v482
      %v484 = vpop.f32.mrf.mxu0
      %v485 = vpop.f32.mrf.mxu0
      %v486 = vadd.f32 %v337, %v485
      %v487 = vpop.f32.mrf.mxu0
      %488 = vmatprep.mubr.bf16.mxu0 0
      %489 = vmatmul.mubr.bf16.gmra.mxu0 %v374
      %v490 = vpop.f32.mrf.mxu0
      %v491 = vadd.f32 %v337, %v490
      %v492 = vpop.f32.mrf.mxu0
      %v493 = vpop.f32.mrf.mxu0
      %v494 = vadd.f32 %v337, %v493
      %v495 = vpop.f32.mrf.mxu0
      %496 = vmatprep.mubr.bf16.mxu0 0
      %497 = vmatmul.mubr.bf16.gmra.mxu0 %v377
      %v498 = vpop.f32.mrf.mxu0
      %v499 = vadd.f32 %v337, %v498
      %v500 = vpop.f32.mrf.mxu0
      %v501 = vpop.f32.mrf.mxu0
      %v502 = vadd.f32 %v337, %v501
      %v503 = vpop.f32.mrf.mxu0
      %504 = vmatprep.mubr.bf16.mxu0 0
      %505 = vmatmul.mubr.bf16.gmra.mxu0 %v380
      %v506 = vpop.f32.mrf.mxu0
      %v507 = vadd.f32 %v337, %v506
      %v508 = vpop.f32.mrf.mxu0
      %v509 = vpop.f32.mrf.mxu0
      %v510 = vadd.f32 %v337, %v509
      %v511 = vpop.f32.mrf.mxu0
      %512 = vmatprep.mubr.bf16.mxu0 0
      %513 = vmatmul.mubr.bf16.gmra.mxu0 %v383
      %v514 = vpop.f32.mrf.mxu0
      %v515 = vadd.f32 %v337, %v514
      %v516 = vpop.f32.mrf.mxu0
      %v517 = vpop.f32.mrf.mxu0
      %v518 = vadd.f32 %v337, %v517
      %v519 = vpop.f32.mrf.mxu0
      %520 = vmatprep.mubr.bf16.mxu0 0
      %521 = vmatmul.mubr.bf16.gmra.mxu0 %v386
      %v522 = vpop.f32.mrf.mxu0
      %v523 = vadd.f32 %v337, %v522
      %v524 = vpop.f32.mrf.mxu0
      %v525 = vpop.f32.mrf.mxu0
      %v526 = vadd.f32 %v337, %v525
      %v527 = vpop.f32.mrf.mxu0
      %528 = vmatprep.mubr.bf16.mxu0 0
      %529 = vmatmul.mubr.bf16.gmra.mxu0 %v389
      %v530 = vpop.f32.mrf.mxu0
      %v531 = vadd.f32 %v337, %v530
      %v532 = vpop.f32.mrf.mxu0
      %v533 = vpop.f32.mrf.mxu0
      %v534 = vadd.f32 %v337, %v533
      %v535 = vpop.f32.mrf.mxu0
      %536 = vmatprep.mubr.bf16.mxu0 0
      %537 = vmatmul.mubr.bf16.gmra.mxu0 %v392
      %v538 = vpop.f32.mrf.mxu0
      %v539 = vadd.f32 %v337, %v538
      %v540 = vpop.f32.mrf.mxu0
      %v541 = vpop.f32.mrf.mxu0
      %v542 = vadd.f32 %v337, %v541
      %v543 = vpop.f32.mrf.mxu0
      %544 = vmatprep.mubr.bf16.mxu0 0
      %545 = vmatmul.mubr.bf16.gmra.mxu0 %v395
      %v546 = vpop.f32.mrf.mxu0
      %v547 = vadd.f32 %v337, %v546
      %v548 = vpop.f32.mrf.mxu0
      %v549 = vpop.f32.mrf.mxu0
      %v550 = vadd.f32 %v337, %v549
      %v551 = vpop.f32.mrf.mxu0
      %552 = vmatprep.mubr.bf16.mxu0 0
      %553 = vmatmul.mubr.bf16.gmra.mxu0 %v398
      %v554 = vpop.f32.mrf.mxu0
      %v555 = vadd.f32 %v337, %v554
      %v556 = vpop.f32.mrf.mxu0
      %v557 = vpop.f32.mrf.mxu0
      %v558 = vadd.f32 %v337, %v557
      %v559 = vpop.f32.mrf.mxu0
      %560 = vdwg.mxu0
      %v561 = vmax.f32 %v435, 0.0
      %v562 = vmax.f32 %v438, 0.0
      %v563 = vmax.f32 %v443, 0.0
      %v564 = vmax.f32 %v446, 0.0
      %v565 = vmax.f32 %v451, 0.0
      %v566 = vmax.f32 %v454, 0.0
      %v567 = vmax.f32 %v459, 0.0
      %v568 = vmax.f32 %v462, 0.0
      %v569 = vmax.f32 %v467, 0.0
      %v570 = vmax.f32 %v470, 0.0
      %v571 = vmax.f32 %v475, 0.0
      %v572 = vmax.f32 %v478, 0.0
      %v573 = vmax.f32 %v483, 0.0
      %v574 = vmax.f32 %v486, 0.0
      %v575 = vmax.f32 %v491, 0.0
      %v576 = vmax.f32 %v494, 0.0
      %v577 = vmax.f32 %v499, 0.0
      %v578 = vmax.f32 %v502, 0.0
      %v579 = vmax.f32 %v507, 0.0
      %v580 = vmax.f32 %v510, 0.0
      %v581 = vmax.f32 %v515, 0.0
      %v582 = vmax.f32 %v518, 0.0
      %v583 = vmax.f32 %v523, 0.0
      %v584 = vmax.f32 %v526, 0.0
      %v585 = vmax.f32 %v531, 0.0
      %v586 = vmax.f32 %v534, 0.0
      %v587 = vmax.f32 %v539, 0.0
      %v588 = vmax.f32 %v542, 0.0
      %v589 = vmax.f32 %v547, 0.0
      %v590 = vmax.f32 %v550, 0.0
      %v591 = vmax.f32 %v555, 0.0
      %v592 = vmax.f32 %v558, 0.0
      %vm593 = vcmask 64512
      %594 = vst.msk [vmem:[#allocation2] sm:$0xff] %vm593, 0.0
      %595 = vst.msk [vmem:[#allocation2 + $0x8] sm:$0xff] %vm593, 0.0
      %vm596 = vcmask 58368
      %597 = vst.msk [vmem:[#allocation2 + $0x10] sm:$0x3] %vm596, 0.0
      %598 = vst.msk [vmem:[#allocation2 + $0x18] sm:$0xff] %vm593, 0.0
      %599 = vst.msk [vmem:[#allocation2 + $0x20] sm:$0xff] %vm593, 0.0
      %600 = vst.msk [vmem:[#allocation2 + $0x28] sm:$0x3] %vm596, 0.0
      %601 = vst.msk [vmem:[#allocation2 + $0x30] sm:$0xff] %vm593, 0.0
      %602 = vst.msk [vmem:[#allocation2 + $0x38] sm:$0xff] %vm593, 0.0
      %603 = vst.msk [vmem:[#allocation2 + $0x40] sm:$0x3] %vm596, 0.0
      %604 = vst.msk [vmem:[#allocation2 + $0x48] sm:$0xff] %vm593, 0.0
      %605 = vst.msk [vmem:[#allocation2 + $0x50] sm:$0xff] %vm593, 0.0
      %606 = vst.msk [vmem:[#allocation2 + $0x58] sm:$0x3] %vm596, 0.0
      %607 = vst.msk [vmem:[#allocation2 + $0x60] sm:$0xff] %vm593, 0.0
      %608 = vst.msk [vmem:[#allocation2 + $0x68] sm:$0xff] %vm593, 0.0
      %609 = vst.msk [vmem:[#allocation2 + $0x70] sm:$0x3] %vm596, 0.0
      %610 = vst.msk [vmem:[#allocation2 + $0x78] sm:$0xff] %vm593, 0.0
      %611 = vst.msk [vmem:[#allocation2 + $0x80] sm:$0xff] %vm593, 0.0
      %612 = vst.msk [vmem:[#allocation2 + $0x88] sm:$0x3] %vm596, 0.0
      %613 = vst.msk [vmem:[#allocation2 + $0x90] sm:$0xff] %vm593, 0.0
      %614 = vst.msk [vmem:[#allocation2 + $0x98] sm:$0xff] %vm593, 0.0
      %615 = vst.msk [vmem:[#allocation2 + $0xa0] sm:$0x3] %vm596, 0.0
      %616 = vst.msk [vmem:[#allocation2 + $0xa8] sm:$0xff] %vm593, 0.0
      %617 = vst.msk [vmem:[#allocation2 + $0xb0] sm:$0xff] %vm593, 0.0
      %618 = vst.msk [vmem:[#allocation2 + $0xb8] sm:$0x3] %vm596, 0.0
      %619 = vst.msk [vmem:[#allocation2 + $0xc0] sm:$0xff] %vm593, 0.0
      %620 = vst.msk [vmem:[#allocation2 + $0xc8] sm:$0xff] %vm593, 0.0
      %621 = vst.msk [vmem:[#allocation2 + $0xd0] sm:$0x3] %vm596, 0.0
      %622 = vst.msk [vmem:[#allocation2 + $0xd8] sm:$0xff] %vm593, 0.0
      %623 = vst.msk [vmem:[#allocation2 + $0xe0] sm:$0xff] %vm593, 0.0
      %624 = vst.msk [vmem:[#allocation2 + $0xe8] sm:$0x3] %vm596, 0.0
      %625 = vst.msk [vmem:[#allocation2 + $0xf0] sm:$0xff] %vm593, 0.0
      %626 = vst.msk [vmem:[#allocation2 + $0xf8] sm:$0xff] %vm593, 0.0
      %627 = vst.msk [vmem:[#allocation2 + $0x100] sm:$0x3] %vm596, 0.0
      %628 = vst.msk [vmem:[#allocation2 + $0x108] sm:$0xff] %vm593, 0.0
      %629 = vst.msk [vmem:[#allocation2 + $0x110] sm:$0xff] %vm593, 0.0
      %630 = vst.msk [vmem:[#allocation2 + $0x118] sm:$0x3] %vm596, 0.0
      %631 = vst.msk [vmem:[#allocation2 + $0x120] sm:$0xff] %vm593, 0.0
      %632 = vst.msk [vmem:[#allocation2 + $0x128] sm:$0xff] %vm593, 0.0
      %633 = vst.msk [vmem:[#allocation2 + $0x130] sm:$0x3] %vm596, 0.0
      %634 = vst.msk [vmem:[#allocation2 + $0x138] sm:$0xff] %vm593, 0.0
      %635 = vst.msk [vmem:[#allocation2 + $0x140] sm:$0xff] %vm593, 0.0
      %636 = vst.msk [vmem:[#allocation2 + $0x148] sm:$0x3] %vm596, 0.0
      %637 = vst.msk [vmem:[#allocation2 + $0x150] sm:$0xff] %vm593, 0.0
      %638 = vst.msk [vmem:[#allocation2 + $0x158] sm:$0xff] %vm593, 0.0
      %639 = vst.msk [vmem:[#allocation2 + $0x160] sm:$0x3] %vm596, 0.0
      %640 = vst.msk [vmem:[#allocation2 + $0x168] sm:$0xff] %vm593, 0.0
      %641 = vst.msk [vmem:[#allocation2 + $0x170] sm:$0xff] %vm593, 0.0
      %642 = vst.msk [vmem:[#allocation2 + $0x178] sm:$0x3] %vm596, 0.0
      %643 = vst.msk [vmem:[#allocation2 + $0x180] sm:$0xff] %vm593, 0.0
      %644 = vst.msk [vmem:[#allocation2 + $0x188] sm:$0xff] %vm593, 0.0
      %645 = vst.msk [vmem:[#allocation2 + $0x190] sm:$0x3] %vm596, 0.0
      %646 = vst.msk [vmem:[#allocation2 + $0x198] sm:$0xff] %vm593, 0.0
      %647 = vst.msk [vmem:[#allocation2 + $0x1a0] sm:$0xff] %vm593, 0.0
      %648 = vst.msk [vmem:[#allocation2 + $0x1a8] sm:$0x3] %vm596, 0.0
      %s649 = scalar_lea.vmem [#allocation2], 24
      %650 = vst.msk [vmem:[%s649 + $0x1] sm:$0xff] %vm593, %v561
      %651 = vst.msk [vmem:[%s649 + $0x9] sm:$0xff] %vm593, %v562
      %652 = vst.msk [vmem:[%s649 + $0x19] sm:$0xff] %vm593, %v563
      %653 = vst.msk [vmem:[%s649 + $0x21] sm:$0xff] %vm593, %v564
      %654 = vst.msk [vmem:[%s649 + $0x31] sm:$0xff] %vm593, %v565
      %655 = vst.msk [vmem:[%s649 + $0x39] sm:$0xff] %vm593, %v566
      %656 = vst.msk [vmem:[%s649 + $0x49] sm:$0xff] %vm593, %v567
      %657 = vst.msk [vmem:[%s649 + $0x51] sm:$0xff] %vm593, %v568
      %658 = vst.msk [vmem:[%s649 + $0x61] sm:$0xff] %vm593, %v569
      %659 = vst.msk [vmem:[%s649 + $0x69] sm:$0xff] %vm593, %v570
      %660 = vst.msk [vmem:[%s649 + $0x79] sm:$0xff] %vm593, %v571
      %661 = vst.msk [vmem:[%s649 + $0x81] sm:$0xff] %vm593, %v572
      %662 = vst.msk [vmem:[%s649 + $0x91] sm:$0xff] %vm593, %v573
      %663 = vst.msk [vmem:[%s649 + $0x99] sm:$0xff] %vm593, %v574
      %664 = vst.msk [vmem:[%s649 + $0xa9] sm:$0xff] %vm593, %v575
      %665 = vst.msk [vmem:[%s649 + $0xb1] sm:$0xff] %vm593, %v576
      %666 = vst.msk [vmem:[%s649 + $0xc1] sm:$0xff] %vm593, %v577
      %667 = vst.msk [vmem:[%s649 + $0xc9] sm:$0xff] %vm593, %v578
      %668 = vst.msk [vmem:[%s649 + $0xd9] sm:$0xff] %vm593, %v579
      %669 = vst.msk [vmem:[%s649 + $0xe1] sm:$0xff] %vm593, %v580
      %670 = vst.msk [vmem:[%s649 + $0xf1] sm:$0xff] %vm593, %v581
      %671 = vst.msk [vmem:[%s649 + $0xf9] sm:$0xff] %vm593, %v582
      %672 = vst.msk [vmem:[%s649 + $0x109] sm:$0xff] %vm593, %v583
      %673 = vst.msk [vmem:[%s649 + $0x111] sm:$0xff] %vm593, %v584
      %674 = vst.msk [vmem:[%s649 + $0x121] sm:$0xff] %vm593, %v585
      %675 = vst.msk [vmem:[%s649 + $0x129] sm:$0xff] %vm593, %v586
      %676 = vst.msk [vmem:[%s649 + $0x139] sm:$0xff] %vm593, %v587
      %677 = vst.msk [vmem:[%s649 + $0x141] sm:$0xff] %vm593, %v588
      %678 = vst.msk [vmem:[%s649 + $0x151] sm:$0xff] %vm593, %v589
      %679 = vst.msk [vmem:[%s649 + $0x159] sm:$0xff] %vm593, %v590
      %680 = vst.msk [vmem:[%s649 + $0x169] sm:$0xff] %vm593, %v591
      %681 = vst.msk [vmem:[%s649 + $0x171] sm:$0xff] %vm593, %v592
      %v682 = vld [vmem:[#allocation2] sm:$0xff]
      %v683 = vld [vmem:[#allocation2 + $0x8] sm:$0xff]
      %v684 = vld [vmem:[#allocation2 + $0x18] sm:$0xff]
      %v685 = vld [vmem:[#allocation2 + $0x20] sm:$0xff]
      %v686 = vld [vmem:[#allocation2 + $0x30] sm:$0xff]
      %v687 = vld [vmem:[#allocation2 + $0x38] sm:$0xff]
      %v688 = vld [vmem:[#allocation2 + $0x48] sm:$0xff]
      %v689 = vld [vmem:[#allocation2 + $0x50] sm:$0xff]
      %v690 = vld [vmem:[#allocation2 + $0x60] sm:$0xff]
      %v691 = vld [vmem:[#allocation2 + $0x68] sm:$0xff]
      %v692 = vld [vmem:[#allocation2 + $0x78] sm:$0xff]
      %v693 = vld [vmem:[#allocation2 + $0x80] sm:$0xff]
      %v694 = vld [vmem:[#allocation2 + $0x90] sm:$0xff]
      %v695 = vld [vmem:[#allocation2 + $0x98] sm:$0xff]
      %v696 = vld [vmem:[#allocation2 + $0xa8] sm:$0xff]
      %v697 = vld [vmem:[#allocation2 + $0xb0] sm:$0xff]
      %v698 = vld [vmem:[#allocation2 + $0xc0] sm:$0xff]
      %v699 = vld [vmem:[#allocation2 + $0xc8] sm:$0xff]
      %v700 = vld [vmem:[#allocation2 + $0xd8] sm:$0xff]
      %v701 = vld [vmem:[#allocation2 + $0xe0] sm:$0xff]
      %v702 = vld [vmem:[#allocation2 + $0xf0] sm:$0xff]
      %v703 = vld [vmem:[#allocation2 + $0xf8] sm:$0xff]
      %v704 = vld [vmem:[#allocation2 + $0x108] sm:$0xff]
      %v705 = vld [vmem:[#allocation2 + $0x110] sm:$0xff]
      %v706 = vld [vmem:[#allocation2 + $0x120] sm:$0xff]
      %v707 = vld [vmem:[#allocation2 + $0x128] sm:$0xff]
      %v708 = vld [vmem:[#allocation2 + $0x138] sm:$0xff]
      %v709 = vld [vmem:[#allocation2 + $0x140] sm:$0xff]
      %v710 = vld [vmem:[#allocation2 + $0x150] sm:$0xff]
      %v711 = vld [vmem:[#allocation2 + $0x158] sm:$0xff]
      %v712 = vld [vmem:[#allocation2 + $0x168] sm:$0xff]
      %v713 = vld [vmem:[#allocation2 + $0x170] sm:$0xff]
      %v714 = vld [vmem:[#allocation2 + $0x1] sm:$0xff]
      %v715 = vld [vmem:[#allocation2 + $0x9] sm:$0xff]
      %v716 = vld [vmem:[#allocation2 + $0x19] sm:$0xff]
      %v717 = vld [vmem:[#allocation2 + $0x21] sm:$0xff]
      %v718 = vld [vmem:[#allocation2 + $0x31] sm:$0xff]
      %v719 = vld [vmem:[#allocation2 + $0x39] sm:$0xff]
      %v720 = vld [vmem:[#allocation2 + $0x49] sm:$0xff]
      %v721 = vld [vmem:[#allocation2 + $0x51] sm:$0xff]
      %v722 = vld [vmem:[#allocation2 + $0x61] sm:$0xff]
      %v723 = vld [vmem:[#allocation2 + $0x69] sm:$0xff]
      %v724 = vld [vmem:[#allocation2 + $0x79] sm:$0xff]
      %v725 = vld [vmem:[#allocation2 + $0x81] sm:$0xff]
      %v726 = vld [vmem:[#allocation2 + $0x91] sm:$0xff]
      %v727 = vld [vmem:[#allocation2 + $0x99] sm:$0xff]
      %v728 = vld [vmem:[#allocation2 + $0xa9] sm:$0xff]
      %v729 = vld [vmem:[#allocation2 + $0xb1] sm:$0xff]
      %v730 = vld [vmem:[#allocation2 + $0xc1] sm:$0xff]
      %v731 = vld [vmem:[#allocation2 + $0xc9] sm:$0xff]
      %v732 = vld [vmem:[#allocation2 + $0xd9] sm:$0xff]
      %v733 = vld [vmem:[#allocation2 + $0xe1] sm:$0xff]
      %v734 = vld [vmem:[#allocation2 + $0xf1] sm:$0xff]
      %v735 = vld [vmem:[#allocation2 + $0xf9] sm:$0xff]
      %v736 = vld [vmem:[#allocation2 + $0x109] sm:$0xff]
      %v737 = vld [vmem:[#allocation2 + $0x111] sm:$0xff]
      %v738 = vld [vmem:[#allocation2 + $0x121] sm:$0xff]
      %v739 = vld [vmem:[#allocation2 + $0x129] sm:$0xff]
      %v740 = vld [vmem:[#allocation2 + $0x139] sm:$0xff]
      %v741 = vld [vmem:[#allocation2 + $0x141] sm:$0xff]
      %v742 = vld [vmem:[#allocation2 + $0x151] sm:$0xff]
      %v743 = vld [vmem:[#allocation2 + $0x159] sm:$0xff]
      %v744 = vld [vmem:[#allocation2 + $0x169] sm:$0xff]
      %v745 = vld [vmem:[#allocation2 + $0x171] sm:$0xff]
      %v746 = vld [vmem:[#allocation2 + $0x2] sm:$0xff]
      %v747 = vld [vmem:[#allocation2 + $0xa] sm:$0xff]
      %v748 = vld [vmem:[#allocation2 + $0x1a] sm:$0xff]
      %v749 = vld [vmem:[#allocation2 + $0x22] sm:$0xff]
      %v750 = vld [vmem:[#allocation2 + $0x32] sm:$0xff]
      %v751 = vld [vmem:[#allocation2 + $0x3a] sm:$0xff]
      %v752 = vld [vmem:[#allocation2 + $0x4a] sm:$0xff]
      %v753 = vld [vmem:[#allocation2 + $0x52] sm:$0xff]
      %v754 = vld [vmem:[#allocation2 + $0x62] sm:$0xff]
      %v755 = vld [vmem:[#allocation2 + $0x6a] sm:$0xff]
      %v756 = vld [vmem:[#allocation2 + $0x7a] sm:$0xff]
      %v757 = vld [vmem:[#allocation2 + $0x82] sm:$0xff]
      %v758 = vld [vmem:[#allocation2 + $0x92] sm:$0xff]
      %v759 = vld [vmem:[#allocation2 + $0x9a] sm:$0xff]
      %v760 = vld [vmem:[#allocation2 + $0xaa] sm:$0xff]
      %v761 = vld [vmem:[#allocation2 + $0xb2] sm:$0xff]
      %v762 = vld [vmem:[#allocation2 + $0xc2] sm:$0xff]
      %v763 = vld [vmem:[#allocation2 + $0xca] sm:$0xff]
      %v764 = vld [vmem:[#allocation2 + $0xda] sm:$0xff]
      %v765 = vld [vmem:[#allocation2 + $0xe2] sm:$0xff]
      %v766 = vld [vmem:[#allocation2 + $0xf2] sm:$0xff]
      %v767 = vld [vmem:[#allocation2 + $0xfa] sm:$0xff]
      %v768 = vld [vmem:[#allocation2 + $0x10a] sm:$0xff]
      %v769 = vld [vmem:[#allocation2 + $0x112] sm:$0xff]
      %v770 = vld [vmem:[#allocation2 + $0x122] sm:$0xff]
      %v771 = vld [vmem:[#allocation2 + $0x12a] sm:$0xff]
      %v772 = vld [vmem:[#allocation2 + $0x13a] sm:$0xff]
      %v773 = vld [vmem:[#allocation2 + $0x142] sm:$0xff]
      %v774 = vld [vmem:[#allocation2 + $0x152] sm:$0xff]
      %v775 = vld [vmem:[#allocation2 + $0x15a] sm:$0xff]
      %v776 = vld [vmem:[#allocation2 + $0x16a] sm:$0xff]
      %v777 = vld [vmem:[#allocation2 + $0x172] sm:$0xff]
      %v778 = vld [vmem:[%s649] sm:$0xff]
      %v779 = vld [vmem:[%s649 + $0x8] sm:$0xff]
      %v780 = vld [vmem:[%s649 + $0x18] sm:$0xff]
      %v781 = vld [vmem:[%s649 + $0x20] sm:$0xff]
      %v782 = vld [vmem:[%s649 + $0x30] sm:$0xff]
      %v783 = vld [vmem:[%s649 + $0x38] sm:$0xff]
      %v784 = vld [vmem:[%s649 + $0x48] sm:$0xff]
      %v785 = vld [vmem:[%s649 + $0x50] sm:$0xff]
      %v786 = vld [vmem:[%s649 + $0x60] sm:$0xff]
      %v787 = vld [vmem:[%s649 + $0x68] sm:$0xff]
      %v788 = vld [vmem:[%s649 + $0x78] sm:$0xff]
      %v789 = vld [vmem:[%s649 + $0x80] sm:$0xff]
      %v790 = vld [vmem:[%s649 + $0x90] sm:$0xff]
      %v791 = vld [vmem:[%s649 + $0x98] sm:$0xff]
      %v792 = vld [vmem:[%s649 + $0xa8] sm:$0xff]
      %v793 = vld [vmem:[%s649 + $0xb0] sm:$0xff]
      %v794 = vld [vmem:[%s649 + $0xc0] sm:$0xff]
      %v795 = vld [vmem:[%s649 + $0xc8] sm:$0xff]
      %v796 = vld [vmem:[%s649 + $0xd8] sm:$0xff]
      %v797 = vld [vmem:[%s649 + $0xe0] sm:$0xff]
      %v798 = vld [vmem:[%s649 + $0xf0] sm:$0xff]
      %v799 = vld [vmem:[%s649 + $0xf8] sm:$0xff]
      %v800 = vld [vmem:[%s649 + $0x108] sm:$0xff]
      %v801 = vld [vmem:[%s649 + $0x110] sm:$0xff]
      %v802 = vld [vmem:[%s649 + $0x120] sm:$0xff]
      %v803 = vld [vmem:[%s649 + $0x128] sm:$0xff]
      %v804 = vld [vmem:[%s649 + $0x138] sm:$0xff]
      %v805 = vld [vmem:[%s649 + $0x140] sm:$0xff]
      %v806 = vld [vmem:[%s649 + $0x150] sm:$0xff]
      %v807 = vld [vmem:[%s649 + $0x158] sm:$0xff]
      %v808 = vld [vmem:[%s649 + $0x168] sm:$0xff]
      %v809 = vld [vmem:[%s649 + $0x170] sm:$0xff]
      %v810 = vld [vmem:[%s649 + $0x1] sm:$0xff]
      %v811 = vld [vmem:[%s649 + $0x9] sm:$0xff]
      %v812 = vld [vmem:[%s649 + $0x19] sm:$0xff]
      %v813 = vld [vmem:[%s649 + $0x21] sm:$0xff]
      %v814 = vld [vmem:[%s649 + $0x31] sm:$0xff]
      %v815 = vld [vmem:[%s649 + $0x39] sm:$0xff]
      %v816 = vld [vmem:[%s649 + $0x49] sm:$0xff]
      %v817 = vld [vmem:[%s649 + $0x51] sm:$0xff]
      %v818 = vld [vmem:[%s649 + $0x61] sm:$0xff]
      %v819 = vld [vmem:[%s649 + $0x69] sm:$0xff]
      %v820 = vld [vmem:[%s649 + $0x79] sm:$0xff]
      %v821 = vld [vmem:[%s649 + $0x81] sm:$0xff]
      %v822 = vld [vmem:[%s649 + $0x91] sm:$0xff]
      %v823 = vld [vmem:[%s649 + $0x99] sm:$0xff]
      %v824 = vld [vmem:[%s649 + $0xa9] sm:$0xff]
      %v825 = vld [vmem:[%s649 + $0xb1] sm:$0xff]
      %v826 = vld [vmem:[%s649 + $0xc1] sm:$0xff]
      %v827 = vld [vmem:[%s649 + $0xc9] sm:$0xff]
      %v828 = vld [vmem:[%s649 + $0xd9] sm:$0xff]
      %v829 = vld [vmem:[%s649 + $0xe1] sm:$0xff]
      %v830 = vld [vmem:[%s649 + $0xf1] sm:$0xff]
      %v831 = vld [vmem:[%s649 + $0xf9] sm:$0xff]
      %v832 = vld [vmem:[%s649 + $0x109] sm:$0xff]
      %v833 = vld [vmem:[%s649 + $0x111] sm:$0xff]
      %v834 = vld [vmem:[%s649 + $0x121] sm:$0xff]
      %v835 = vld [vmem:[%s649 + $0x129] sm:$0xff]
      %v836 = vld [vmem:[%s649 + $0x139] sm:$0xff]
      %v837 = vld [vmem:[%s649 + $0x141] sm:$0xff]
      %v838 = vld [vmem:[%s649 + $0x151] sm:$0xff]
      %v839 = vld [vmem:[%s649 + $0x159] sm:$0xff]
      %v840 = vld [vmem:[%s649 + $0x169] sm:$0xff]
      %v841 = vld [vmem:[%s649 + $0x171] sm:$0xff]
      %v842 = vld [vmem:[%s649 + $0x2] sm:$0xff]
      %v843 = vld [vmem:[%s649 + $0xa] sm:$0xff]
      %v844 = vld [vmem:[%s649 + $0x1a] sm:$0xff]
      %v845 = vld [vmem:[%s649 + $0x22] sm:$0xff]
      %v846 = vld [vmem:[%s649 + $0x32] sm:$0xff]
      %v847 = vld [vmem:[%s649 + $0x3a] sm:$0xff]
      %v848 = vld [vmem:[%s649 + $0x4a] sm:$0xff]
      %v849 = vld [vmem:[%s649 + $0x52] sm:$0xff]
      %v850 = vld [vmem:[%s649 + $0x62] sm:$0xff]
      %v851 = vld [vmem:[%s649 + $0x6a] sm:$0xff]
      %v852 = vld [vmem:[%s649 + $0x7a] sm:$0xff]
      %v853 = vld [vmem:[%s649 + $0x82] sm:$0xff]
      %v854 = vld [vmem:[%s649 + $0x92] sm:$0xff]
      %v855 = vld [vmem:[%s649 + $0x9a] sm:$0xff]
      %v856 = vld [vmem:[%s649 + $0xaa] sm:$0xff]
      %v857 = vld [vmem:[%s649 + $0xb2] sm:$0xff]
      %v858 = vld [vmem:[%s649 + $0xc2] sm:$0xff]
      %v859 = vld [vmem:[%s649 + $0xca] sm:$0xff]
      %v860 = vld [vmem:[%s649 + $0xda] sm:$0xff]
      %v861 = vld [vmem:[%s649 + $0xe2] sm:$0xff]
      %v862 = vld [vmem:[%s649 + $0xf2] sm:$0xff]
      %v863 = vld [vmem:[%s649 + $0xfa] sm:$0xff]
      %v864 = vld [vmem:[%s649 + $0x10a] sm:$0xff]
      %v865 = vld [vmem:[%s649 + $0x112] sm:$0xff]
      %v866 = vld [vmem:[%s649 + $0x122] sm:$0xff]
      %v867 = vld [vmem:[%s649 + $0x12a] sm:$0xff]
      %v868 = vld [vmem:[%s649 + $0x13a] sm:$0xff]
      %v869 = vld [vmem:[%s649 + $0x142] sm:$0xff]
      %v870 = vld [vmem:[%s649 + $0x152] sm:$0xff]
      %v871 = vld [vmem:[%s649 + $0x15a] sm:$0xff]
      %v872 = vld [vmem:[%s649 + $0x16a] sm:$0xff]
      %v873 = vld [vmem:[%s649 + $0x172] sm:$0xff]
      %s874 = scalar_lea.vmem [#allocation2], 48
      %v875 = vld [vmem:[%s874] sm:$0xff]
      %v876 = vld [vmem:[%s874 + $0x8] sm:$0xff]
      %v877 = vld [vmem:[%s874 + $0x18] sm:$0xff]
      %v878 = vld [vmem:[%s874 + $0x20] sm:$0xff]
      %v879 = vld [vmem:[%s874 + $0x30] sm:$0xff]
      %v880 = vld [vmem:[%s874 + $0x38] sm:$0xff]
      %v881 = vld [vmem:[%s874 + $0x48] sm:$0xff]
      %v882 = vld [vmem:[%s874 + $0x50] sm:$0xff]
      %v883 = vld [vmem:[%s874 + $0x60] sm:$0xff]
      %v884 = vld [vmem:[%s874 + $0x68] sm:$0xff]
      %v885 = vld [vmem:[%s874 + $0x78] sm:$0xff]
      %v886 = vld [vmem:[%s874 + $0x80] sm:$0xff]
      %v887 = vld [vmem:[%s874 + $0x90] sm:$0xff]
      %v888 = vld [vmem:[%s874 + $0x98] sm:$0xff]
      %v889 = vld [vmem:[%s874 + $0xa8] sm:$0xff]
      %v890 = vld [vmem:[%s874 + $0xb0] sm:$0xff]
      %v891 = vld [vmem:[%s874 + $0xc0] sm:$0xff]
      %v892 = vld [vmem:[%s874 + $0xc8] sm:$0xff]
      %v893 = vld [vmem:[%s874 + $0xd8] sm:$0xff]
      %v894 = vld [vmem:[%s874 + $0xe0] sm:$0xff]
      %v895 = vld [vmem:[%s874 + $0xf0] sm:$0xff]
      %v896 = vld [vmem:[%s874 + $0xf8] sm:$0xff]
      %v897 = vld [vmem:[%s874 + $0x108] sm:$0xff]
      %v898 = vld [vmem:[%s874 + $0x110] sm:$0xff]
      %v899 = vld [vmem:[%s874 + $0x120] sm:$0xff]
      %v900 = vld [vmem:[%s874 + $0x128] sm:$0xff]
      %v901 = vld [vmem:[%s874 + $0x138] sm:$0xff]
      %v902 = vld [vmem:[%s874 + $0x140] sm:$0xff]
      %v903 = vld [vmem:[%s874 + $0x150] sm:$0xff]
      %v904 = vld [vmem:[%s874 + $0x158] sm:$0xff]
      %v905 = vld [vmem:[%s874 + $0x168] sm:$0xff]
      %v906 = vld [vmem:[%s874 + $0x170] sm:$0xff]
      %v907 = vld [vmem:[%s874 + $0x1] sm:$0xff]
      %v908 = vld [vmem:[%s874 + $0x9] sm:$0xff]
      %v909 = vld [vmem:[%s874 + $0x19] sm:$0xff]
      %v910 = vld [vmem:[%s874 + $0x21] sm:$0xff]
      %v911 = vld [vmem:[%s874 + $0x31] sm:$0xff]
      %v912 = vld [vmem:[%s874 + $0x39] sm:$0xff]
      %v913 = vld [vmem:[%s874 + $0x49] sm:$0xff]
      %v914 = vld [vmem:[%s874 + $0x51] sm:$0xff]
      %v915 = vld [vmem:[%s874 + $0x61] sm:$0xff]
      %v916 = vld [vmem:[%s874 + $0x69] sm:$0xff]
      %v917 = vld [vmem:[%s874 + $0x79] sm:$0xff]
      %v918 = vld [vmem:[%s874 + $0x81] sm:$0xff]
      %v919 = vld [vmem:[%s874 + $0x91] sm:$0xff]
      %v920 = vld [vmem:[%s874 + $0x99] sm:$0xff]
      %v921 = vld [vmem:[%s874 + $0xa9] sm:$0xff]
      %v922 = vld [vmem:[%s874 + $0xb1] sm:$0xff]
      %v923 = vld [vmem:[%s874 + $0xc1] sm:$0xff]
      %v924 = vld [vmem:[%s874 + $0xc9] sm:$0xff]
      %v925 = vld [vmem:[%s874 + $0xd9] sm:$0xff]
      %v926 = vld [vmem:[%s874 + $0xe1] sm:$0xff]
      %v927 = vld [vmem:[%s874 + $0xf1] sm:$0xff]
      %v928 = vld [vmem:[%s874 + $0xf9] sm:$0xff]
      %v929 = vld [vmem:[%s874 + $0x109] sm:$0xff]
      %v930 = vld [vmem:[%s874 + $0x111] sm:$0xff]
      %v931 = vld [vmem:[%s874 + $0x121] sm:$0xff]
      %v932 = vld [vmem:[%s874 + $0x129] sm:$0xff]
      %v933 = vld [vmem:[%s874 + $0x139] sm:$0xff]
      %v934 = vld [vmem:[%s874 + $0x141] sm:$0xff]
      %v935 = vld [vmem:[%s874 + $0x151] sm:$0xff]
      %v936 = vld [vmem:[%s874 + $0x159] sm:$0xff]
      %v937 = vld [vmem:[%s874 + $0x169] sm:$0xff]
      %v938 = vld [vmem:[%s874 + $0x171] sm:$0xff]
      %v939 = vld [vmem:[%s874 + $0x2] sm:$0xff]
      %v940 = vld [vmem:[%s874 + $0xa] sm:$0xff]
      %v941 = vld [vmem:[%s874 + $0x1a] sm:$0xff]
      %v942 = vld [vmem:[%s874 + $0x22] sm:$0xff]
      %v943 = vld [vmem:[%s874 + $0x32] sm:$0xff]
      %v944 = vld [vmem:[%s874 + $0x3a] sm:$0xff]
      %v945 = vld [vmem:[%s874 + $0x4a] sm:$0xff]
      %v946 = vld [vmem:[%s874 + $0x52] sm:$0xff]
      %v947 = vld [vmem:[%s874 + $0x62] sm:$0xff]
      %v948 = vld [vmem:[%s874 + $0x6a] sm:$0xff]
      %v949 = vld [vmem:[%s874 + $0x7a] sm:$0xff]
      %v950 = vld [vmem:[%s874 + $0x82] sm:$0xff]
      %v951 = vld [vmem:[%s874 + $0x92] sm:$0xff]
      %v952 = vld [vmem:[%s874 + $0x9a] sm:$0xff]
      %v953 = vld [vmem:[%s874 + $0xaa] sm:$0xff]
      %v954 = vld [vmem:[%s874 + $0xb2] sm:$0xff]
      %v955 = vld [vmem:[%s874 + $0xc2] sm:$0xff]
      %v956 = vld [vmem:[%s874 + $0xca] sm:$0xff]
      %v957 = vld [vmem:[%s874 + $0xda] sm:$0xff]
      %v958 = vld [vmem:[%s874 + $0xe2] sm:$0xff]
      %v959 = vld [vmem:[%s874 + $0xf2] sm:$0xff]
      %v960 = vld [vmem:[%s874 + $0xfa] sm:$0xff]
      %v961 = vld [vmem:[%s874 + $0x10a] sm:$0xff]
      %v962 = vld [vmem:[%s874 + $0x112] sm:$0xff]
      %v963 = vld [vmem:[%s874 + $0x122] sm:$0xff]
      %v964 = vld [vmem:[%s874 + $0x12a] sm:$0xff]
      %v965 = vld [vmem:[%s874 + $0x13a] sm:$0xff]
      %v966 = vld [vmem:[%s874 + $0x142] sm:$0xff]
      %v967 = vld [vmem:[%s874 + $0x152] sm:$0xff]
      %v968 = vld [vmem:[%s874 + $0x15a] sm:$0xff]
      %v969 = vld [vmem:[%s874 + $0x16a] sm:$0xff]
      %v970 = vld [vmem:[%s874 + $0x172] sm:$0xff]
      %1003 = vrot.lane.b32.xlu0 %v714, 8
      %v1004 = vpop.permute.xlu0 %1003
      %1005 = vrot.lane.b32.xlu0 %v715, 8
      %v1006 = vpop.permute.xlu0 %1005
      %1007 = vrot.lane.b32.xlu0 %v716, 8
      %v1008 = vpop.permute.xlu0 %1007
      %1009 = vrot.lane.b32.xlu0 %v717, 8
      %v1010 = vpop.permute.xlu0 %1009
      %1011 = vrot.lane.b32.xlu0 %v718, 8
      %v1012 = vpop.permute.xlu0 %1011
      %1013 = vrot.lane.b32.xlu0 %v719, 8
      %v1014 = vpop.permute.xlu0 %1013
      %1015 = vrot.lane.b32.xlu0 %v720, 8
      %v1016 = vpop.permute.xlu0 %1015
      %1017 = vrot.lane.b32.xlu0 %v721, 8
      %v1018 = vpop.permute.xlu0 %1017
      %1019 = vrot.lane.b32.xlu0 %v722, 8
      %v1020 = vpop.permute.xlu0 %1019
      %1021 = vrot.lane.b32.xlu0 %v723, 8
      %v1022 = vpop.permute.xlu0 %1021
      %1023 = vrot.lane.b32.xlu0 %v724, 8
      %v1024 = vpop.permute.xlu0 %1023
      %1025 = vrot.lane.b32.xlu0 %v725, 8
      %v1026 = vpop.permute.xlu0 %1025
      %1027 = vrot.lane.b32.xlu0 %v726, 8
      %v1028 = vpop.permute.xlu0 %1027
      %1029 = vrot.lane.b32.xlu0 %v727, 8
      %v1030 = vpop.permute.xlu0 %1029
      %1031 = vrot.lane.b32.xlu0 %v728, 8
      %v1032 = vpop.permute.xlu0 %1031
      %1033 = vrot.lane.b32.xlu0 %v729, 8
      %v1034 = vpop.permute.xlu0 %1033
      %1035 = vrot.lane.b32.xlu0 %v730, 8
      %v1036 = vpop.permute.xlu0 %1035
      %1037 = vrot.lane.b32.xlu0 %v731, 8
      %v1038 = vpop.permute.xlu0 %1037
      %1039 = vrot.lane.b32.xlu0 %v732, 8
      %v1040 = vpop.permute.xlu0 %1039
      %1041 = vrot.lane.b32.xlu0 %v733, 8
      %v1042 = vpop.permute.xlu0 %1041
      %1043 = vrot.lane.b32.xlu0 %v734, 8
      %v1044 = vpop.permute.xlu0 %1043
      %1045 = vrot.lane.b32.xlu0 %v735, 8
      %v1046 = vpop.permute.xlu0 %1045
      %1047 = vrot.lane.b32.xlu0 %v736, 8
      %v1048 = vpop.permute.xlu0 %1047
      %1049 = vrot.lane.b32.xlu0 %v737, 8
      %v1050 = vpop.permute.xlu0 %1049
      %1051 = vrot.lane.b32.xlu0 %v738, 8
      %v1052 = vpop.permute.xlu0 %1051
      %1053 = vrot.lane.b32.xlu0 %v739, 8
      %v1054 = vpop.permute.xlu0 %1053
      %1055 = vrot.lane.b32.xlu0 %v740, 8
      %v1056 = vpop.permute.xlu0 %1055
      %1057 = vrot.lane.b32.xlu0 %v741, 8
      %v1058 = vpop.permute.xlu0 %1057
      %1059 = vrot.lane.b32.xlu0 %v742, 8
      %v1060 = vpop.permute.xlu0 %1059
      %1061 = vrot.lane.b32.xlu0 %v743, 8
      %v1062 = vpop.permute.xlu0 %1061
      %1063 = vrot.lane.b32.xlu0 %v744, 8
      %v1064 = vpop.permute.xlu0 %1063
      %1065 = vrot.lane.b32.xlu0 %v745, 8
      %v1066 = vpop.permute.xlu0 %1065
      %1131 = vrot.lane.b32.xlu0 %v746, 16
      %v1132 = vpop.permute.xlu0 %1131
      %1133 = vrot.lane.b32.xlu0 %v747, 16
      %v1134 = vpop.permute.xlu0 %1133
      %1135 = vrot.lane.b32.xlu0 %v748, 16
      %v1136 = vpop.permute.xlu0 %1135
      %1137 = vrot.lane.b32.xlu0 %v749, 16
      %v1138 = vpop.permute.xlu0 %1137
      %1139 = vrot.lane.b32.xlu0 %v750, 16
      %v1140 = vpop.permute.xlu0 %1139
      %1141 = vrot.lane.b32.xlu0 %v751, 16
      %v1142 = vpop.permute.xlu0 %1141
      %1143 = vrot.lane.b32.xlu0 %v752, 16
      %v1144 = vpop.permute.xlu0 %1143
      %1145 = vrot.lane.b32.xlu0 %v753, 16
      %v1146 = vpop.permute.xlu0 %1145
      %1147 = vrot.lane.b32.xlu0 %v754, 16
      %v1148 = vpop.permute.xlu0 %1147
      %1149 = vrot.lane.b32.xlu0 %v755, 16
      %v1150 = vpop.permute.xlu0 %1149
      %1151 = vrot.lane.b32.xlu0 %v756, 16
      %v1152 = vpop.permute.xlu0 %1151
      %1153 = vrot.lane.b32.xlu0 %v757, 16
      %v1154 = vpop.permute.xlu0 %1153
      %1155 = vrot.lane.b32.xlu0 %v758, 16
      %v1156 = vpop.permute.xlu0 %1155
      %1157 = vrot.lane.b32.xlu0 %v759, 16
      %v1158 = vpop.permute.xlu0 %1157
      %1159 = vrot.lane.b32.xlu0 %v760, 16
      %v1160 = vpop.permute.xlu0 %1159
      %1161 = vrot.lane.b32.xlu0 %v761, 16
      %v1162 = vpop.permute.xlu0 %1161
      %1163 = vrot.lane.b32.xlu0 %v762, 16
      %v1164 = vpop.permute.xlu0 %1163
      %1165 = vrot.lane.b32.xlu0 %v763, 16
      %v1166 = vpop.permute.xlu0 %1165
      %1167 = vrot.lane.b32.xlu0 %v764, 16
      %v1168 = vpop.permute.xlu0 %1167
      %1169 = vrot.lane.b32.xlu0 %v765, 16
      %v1170 = vpop.permute.xlu0 %1169
      %1171 = vrot.lane.b32.xlu0 %v766, 16
      %v1172 = vpop.permute.xlu0 %1171
      %1173 = vrot.lane.b32.xlu0 %v767, 16
      %v1174 = vpop.permute.xlu0 %1173
      %1175 = vrot.lane.b32.xlu0 %v768, 16
      %v1176 = vpop.permute.xlu0 %1175
      %1177 = vrot.lane.b32.xlu0 %v769, 16
      %v1178 = vpop.permute.xlu0 %1177
      %1179 = vrot.lane.b32.xlu0 %v770, 16
      %v1180 = vpop.permute.xlu0 %1179
      %1181 = vrot.lane.b32.xlu0 %v771, 16
      %v1182 = vpop.permute.xlu0 %1181
      %1183 = vrot.lane.b32.xlu0 %v772, 16
      %v1184 = vpop.permute.xlu0 %1183
      %1185 = vrot.lane.b32.xlu0 %v773, 16
      %v1186 = vpop.permute.xlu0 %1185
      %1187 = vrot.lane.b32.xlu0 %v774, 16
      %v1188 = vpop.permute.xlu0 %1187
      %1189 = vrot.lane.b32.xlu0 %v775, 16
      %v1190 = vpop.permute.xlu0 %1189
      %1191 = vrot.lane.b32.xlu0 %v776, 16
      %v1192 = vpop.permute.xlu0 %1191
      %1193 = vrot.lane.b32.xlu0 %v777, 16
      %v1194 = vpop.permute.xlu0 %1193
      %1259 = vrot.lane.b32.xlu0 %v778, 24
      %v1260 = vpop.permute.xlu0 %1259
      %1261 = vrot.lane.b32.xlu0 %v779, 24
      %v1262 = vpop.permute.xlu0 %1261
      %1263 = vrot.lane.b32.xlu0 %v780, 24
      %v1264 = vpop.permute.xlu0 %1263
      %1265 = vrot.lane.b32.xlu0 %v781, 24
      %v1266 = vpop.permute.xlu0 %1265
      %1267 = vrot.lane.b32.xlu0 %v782, 24
      %v1268 = vpop.permute.xlu0 %1267
      %1269 = vrot.lane.b32.xlu0 %v783, 24
      %v1270 = vpop.permute.xlu0 %1269
      %1271 = vrot.lane.b32.xlu0 %v784, 24
      %v1272 = vpop.permute.xlu0 %1271
      %1273 = vrot.lane.b32.xlu0 %v785, 24
      %v1274 = vpop.permute.xlu0 %1273
      %1275 = vrot.lane.b32.xlu0 %v786, 24
      %v1276 = vpop.permute.xlu0 %1275
      %1277 = vrot.lane.b32.xlu0 %v787, 24
      %v1278 = vpop.permute.xlu0 %1277
      %1279 = vrot.lane.b32.xlu0 %v788, 24
      %v1280 = vpop.permute.xlu0 %1279
      %1281 = vrot.lane.b32.xlu0 %v789, 24
      %v1282 = vpop.permute.xlu0 %1281
      %1283 = vrot.lane.b32.xlu0 %v790, 24
      %v1284 = vpop.permute.xlu0 %1283
      %1285 = vrot.lane.b32.xlu0 %v791, 24
      %v1286 = vpop.permute.xlu0 %1285
      %1287 = vrot.lane.b32.xlu0 %v792, 24
      %v1288 = vpop.permute.xlu0 %1287
      %1289 = vrot.lane.b32.xlu0 %v793, 24
      %v1290 = vpop.permute.xlu0 %1289
      %1291 = vrot.lane.b32.xlu0 %v794, 24
      %v1292 = vpop.permute.xlu0 %1291
      %1293 = vrot.lane.b32.xlu0 %v795, 24
      %v1294 = vpop.permute.xlu0 %1293
      %1295 = vrot.lane.b32.xlu0 %v796, 24
      %v1296 = vpop.permute.xlu0 %1295
      %1297 = vrot.lane.b32.xlu0 %v797, 24
      %v1298 = vpop.permute.xlu0 %1297
      %1299 = vrot.lane.b32.xlu0 %v798, 24
      %v1300 = vpop.permute.xlu0 %1299
      %1301 = vrot.lane.b32.xlu0 %v799, 24
      %v1302 = vpop.permute.xlu0 %1301
      %1303 = vrot.lane.b32.xlu0 %v800, 24
      %v1304 = vpop.permute.xlu0 %1303
      %1305 = vrot.lane.b32.xlu0 %v801, 24
      %v1306 = vpop.permute.xlu0 %1305
      %1307 = vrot.lane.b32.xlu0 %v802, 24
      %v1308 = vpop.permute.xlu0 %1307
      %1309 = vrot.lane.b32.xlu0 %v803, 24
      %v1310 = vpop.permute.xlu0 %1309
      %1311 = vrot.lane.b32.xlu0 %v804, 24
      %v1312 = vpop.permute.xlu0 %1311
      %1313 = vrot.lane.b32.xlu0 %v805, 24
      %v1314 = vpop.permute.xlu0 %1313
      %1315 = vrot.lane.b32.xlu0 %v806, 24
      %v1316 = vpop.permute.xlu0 %1315
      %1317 = vrot.lane.b32.xlu0 %v807, 24
      %v1318 = vpop.permute.xlu0 %1317
      %1319 = vrot.lane.b32.xlu0 %v808, 24
      %v1320 = vpop.permute.xlu0 %1319
      %1321 = vrot.lane.b32.xlu0 %v809, 24
      %v1322 = vpop.permute.xlu0 %1321
      %1387 = vrot.lane.b32.xlu0 %v810, 32
      %v1388 = vpop.permute.xlu0 %1387
      %1389 = vrot.lane.b32.xlu0 %v811, 32
      %v1390 = vpop.permute.xlu0 %1389
      %1391 = vrot.lane.b32.xlu0 %v812, 32
      %v1392 = vpop.permute.xlu0 %1391
      %1393 = vrot.lane.b32.xlu0 %v813, 32
      %v1394 = vpop.permute.xlu0 %1393
      %1395 = vrot.lane.b32.xlu0 %v814, 32
      %v1396 = vpop.permute.xlu0 %1395
      %1397 = vrot.lane.b32.xlu0 %v815, 32
      %v1398 = vpop.permute.xlu0 %1397
      %1399 = vrot.lane.b32.xlu0 %v816, 32
      %v1400 = vpop.permute.xlu0 %1399
      %1401 = vrot.lane.b32.xlu0 %v817, 32
      %v1402 = vpop.permute.xlu0 %1401
      %1403 = vrot.lane.b32.xlu0 %v818, 32
      %v1404 = vpop.permute.xlu0 %1403
      %1405 = vrot.lane.b32.xlu0 %v819, 32
      %v1406 = vpop.permute.xlu0 %1405
      %1407 = vrot.lane.b32.xlu0 %v820, 32
      %v1408 = vpop.permute.xlu0 %1407
      %1409 = vrot.lane.b32.xlu0 %v821, 32
      %v1410 = vpop.permute.xlu0 %1409
      %1411 = vrot.lane.b32.xlu0 %v822, 32
      %v1412 = vpop.permute.xlu0 %1411
      %1413 = vrot.lane.b32.xlu0 %v823, 32
      %v1414 = vpop.permute.xlu0 %1413
      %1415 = vrot.lane.b32.xlu0 %v824, 32
      %v1416 = vpop.permute.xlu0 %1415
      %1417 = vrot.lane.b32.xlu0 %v825, 32
      %v1418 = vpop.permute.xlu0 %1417
      %1419 = vrot.lane.b32.xlu0 %v826, 32
      %v1420 = vpop.permute.xlu0 %1419
      %1421 = vrot.lane.b32.xlu0 %v827, 32
      %v1422 = vpop.permute.xlu0 %1421
      %1423 = vrot.lane.b32.xlu0 %v828, 32
      %v1424 = vpop.permute.xlu0 %1423
      %1425 = vrot.lane.b32.xlu0 %v829, 32
      %v1426 = vpop.permute.xlu0 %1425
      %1427 = vrot.lane.b32.xlu0 %v830, 32
      %v1428 = vpop.permute.xlu0 %1427
      %1429 = vrot.lane.b32.xlu0 %v831, 32
      %v1430 = vpop.permute.xlu0 %1429
      %1431 = vrot.lane.b32.xlu0 %v832, 32
      %v1432 = vpop.permute.xlu0 %1431
      %1433 = vrot.lane.b32.xlu0 %v833, 32
      %v1434 = vpop.permute.xlu0 %1433
      %1435 = vrot.lane.b32.xlu0 %v834, 32
      %v1436 = vpop.permute.xlu0 %1435
      %1437 = vrot.lane.b32.xlu0 %v835, 32
      %v1438 = vpop.permute.xlu0 %1437
      %1439 = vrot.lane.b32.xlu0 %v836, 32
      %v1440 = vpop.permute.xlu0 %1439
      %1441 = vrot.lane.b32.xlu0 %v837, 32
      %v1442 = vpop.permute.xlu0 %1441
      %1443 = vrot.lane.b32.xlu0 %v838, 32
      %v1444 = vpop.permute.xlu0 %1443
      %1445 = vrot.lane.b32.xlu0 %v839, 32
      %v1446 = vpop.permute.xlu0 %1445
      %1447 = vrot.lane.b32.xlu0 %v840, 32
      %v1448 = vpop.permute.xlu0 %1447
      %1449 = vrot.lane.b32.xlu0 %v841, 32
      %v1450 = vpop.permute.xlu0 %1449
      %1515 = vrot.lane.b32.xlu0 %v842, 40
      %v1516 = vpop.permute.xlu0 %1515
      %1517 = vrot.lane.b32.xlu0 %v843, 40
      %v1518 = vpop.permute.xlu0 %1517
      %1519 = vrot.lane.b32.xlu0 %v844, 40
      %v1520 = vpop.permute.xlu0 %1519
      %1521 = vrot.lane.b32.xlu0 %v845, 40
      %v1522 = vpop.permute.xlu0 %1521
      %1523 = vrot.lane.b32.xlu0 %v846, 40
      %v1524 = vpop.permute.xlu0 %1523
      %1525 = vrot.lane.b32.xlu0 %v847, 40
      %v1526 = vpop.permute.xlu0 %1525
      %1527 = vrot.lane.b32.xlu0 %v848, 40
      %v1528 = vpop.permute.xlu0 %1527
      %1529 = vrot.lane.b32.xlu0 %v849, 40
      %v1530 = vpop.permute.xlu0 %1529
      %1531 = vrot.lane.b32.xlu0 %v850, 40
      %v1532 = vpop.permute.xlu0 %1531
      %1533 = vrot.lane.b32.xlu0 %v851, 40
      %v1534 = vpop.permute.xlu0 %1533
      %1535 = vrot.lane.b32.xlu0 %v852, 40
      %v1536 = vpop.permute.xlu0 %1535
      %1537 = vrot.lane.b32.xlu0 %v853, 40
      %v1538 = vpop.permute.xlu0 %1537
      %1539 = vrot.lane.b32.xlu0 %v854, 40
      %v1540 = vpop.permute.xlu0 %1539
      %1541 = vrot.lane.b32.xlu0 %v855, 40
      %v1542 = vpop.permute.xlu0 %1541
      %1543 = vrot.lane.b32.xlu0 %v856, 40
      %v1544 = vpop.permute.xlu0 %1543
      %1545 = vrot.lane.b32.xlu0 %v857, 40
      %v1546 = vpop.permute.xlu0 %1545
      %1547 = vrot.lane.b32.xlu0 %v858, 40
      %v1548 = vpop.permute.xlu0 %1547
      %1549 = vrot.lane.b32.xlu0 %v859, 40
      %v1550 = vpop.permute.xlu0 %1549
      %1551 = vrot.lane.b32.xlu0 %v860, 40
      %v1552 = vpop.permute.xlu0 %1551
      %1553 = vrot.lane.b32.xlu0 %v861, 40
      %v1554 = vpop.permute.xlu0 %1553
      %1555 = vrot.lane.b32.xlu0 %v862, 40
      %v1556 = vpop.permute.xlu0 %1555
      %1557 = vrot.lane.b32.xlu0 %v863, 40
      %v1558 = vpop.permute.xlu0 %1557
      %1559 = vrot.lane.b32.xlu0 %v864, 40
      %v1560 = vpop.permute.xlu0 %1559
      %1561 = vrot.lane.b32.xlu0 %v865, 40
      %v1562 = vpop.permute.xlu0 %1561
      %1563 = vrot.lane.b32.xlu0 %v866, 40
      %v1564 = vpop.permute.xlu0 %1563
      %1565 = vrot.lane.b32.xlu0 %v867, 40
      %v1566 = vpop.permute.xlu0 %1565
      %1567 = vrot.lane.b32.xlu0 %v868, 40
      %v1568 = vpop.permute.xlu0 %1567
      %1569 = vrot.lane.b32.xlu0 %v869, 40
      %v1570 = vpop.permute.xlu0 %1569
      %1571 = vrot.lane.b32.xlu0 %v870, 40
      %v1572 = vpop.permute.xlu0 %1571
      %1573 = vrot.lane.b32.xlu0 %v871, 40
      %v1574 = vpop.permute.xlu0 %1573
      %1575 = vrot.lane.b32.xlu0 %v872, 40
      %v1576 = vpop.permute.xlu0 %1575
      %1577 = vrot.lane.b32.xlu0 %v873, 40
      %v1578 = vpop.permute.xlu0 %1577
      %1643 = vrot.lane.b32.xlu0 %v875, 48
      %v1644 = vpop.permute.xlu0 %1643
      %1645 = vrot.lane.b32.xlu0 %v876, 48
      %v1646 = vpop.permute.xlu0 %1645
      %1647 = vrot.lane.b32.xlu0 %v877, 48
      %v1648 = vpop.permute.xlu0 %1647
      %1649 = vrot.lane.b32.xlu0 %v878, 48
      %v1650 = vpop.permute.xlu0 %1649
      %1651 = vrot.lane.b32.xlu0 %v879, 48
      %v1652 = vpop.permute.xlu0 %1651
      %1653 = vrot.lane.b32.xlu0 %v880, 48
      %v1654 = vpop.permute.xlu0 %1653
      %1655 = vrot.lane.b32.xlu0 %v881, 48
      %v1656 = vpop.permute.xlu0 %1655
      %1657 = vrot.lane.b32.xlu0 %v882, 48
      %v1658 = vpop.permute.xlu0 %1657
      %1659 = vrot.lane.b32.xlu0 %v883, 48
      %v1660 = vpop.permute.xlu0 %1659
      %1661 = vrot.lane.b32.xlu0 %v884, 48
      %v1662 = vpop.permute.xlu0 %1661
      %1663 = vrot.lane.b32.xlu0 %v885, 48
      %v1664 = vpop.permute.xlu0 %1663
      %1665 = vrot.lane.b32.xlu0 %v886, 48
      %v1666 = vpop.permute.xlu0 %1665
      %1667 = vrot.lane.b32.xlu0 %v887, 48
      %v1668 = vpop.permute.xlu0 %1667
      %1669 = vrot.lane.b32.xlu0 %v888, 48
      %v1670 = vpop.permute.xlu0 %1669
      %1671 = vrot.lane.b32.xlu0 %v889, 48
      %v1672 = vpop.permute.xlu0 %1671
      %1673 = vrot.lane.b32.xlu0 %v890, 48
      %v1674 = vpop.permute.xlu0 %1673
      %1675 = vrot.lane.b32.xlu0 %v891, 48
      %v1676 = vpop.permute.xlu0 %1675
      %1677 = vrot.lane.b32.xlu0 %v892, 48
      %v1678 = vpop.permute.xlu0 %1677
      %1679 = vrot.lane.b32.xlu0 %v893, 48
      %v1680 = vpop.permute.xlu0 %1679
      %1681 = vrot.lane.b32.xlu0 %v894, 48
      %v1682 = vpop.permute.xlu0 %1681
      %1683 = vrot.lane.b32.xlu0 %v895, 48
      %v1684 = vpop.permute.xlu0 %1683
      %1685 = vrot.lane.b32.xlu0 %v896, 48
      %v1686 = vpop.permute.xlu0 %1685
      %1687 = vrot.lane.b32.xlu0 %v897, 48
      %v1688 = vpop.permute.xlu0 %1687
      %1689 = vrot.lane.b32.xlu0 %v898, 48
      %v1690 = vpop.permute.xlu0 %1689
      %1691 = vrot.lane.b32.xlu0 %v899, 48
      %v1692 = vpop.permute.xlu0 %1691
      %1693 = vrot.lane.b32.xlu0 %v900, 48
      %v1694 = vpop.permute.xlu0 %1693
      %1695 = vrot.lane.b32.xlu0 %v901, 48
      %v1696 = vpop.permute.xlu0 %1695
      %1697 = vrot.lane.b32.xlu0 %v902, 48
      %v1698 = vpop.permute.xlu0 %1697
      %1699 = vrot.lane.b32.xlu0 %v903, 48
      %v1700 = vpop.permute.xlu0 %1699
      %1701 = vrot.lane.b32.xlu0 %v904, 48
      %v1702 = vpop.permute.xlu0 %1701
      %1703 = vrot.lane.b32.xlu0 %v905, 48
      %v1704 = vpop.permute.xlu0 %1703
      %1705 = vrot.lane.b32.xlu0 %v906, 48
      %v1706 = vpop.permute.xlu0 %1705
      %1771 = vrot.lane.b32.xlu0 %v907, 56
      %v1772 = vpop.permute.xlu0 %1771
      %1773 = vrot.lane.b32.xlu0 %v908, 56
      %v1774 = vpop.permute.xlu0 %1773
      %1775 = vrot.lane.b32.xlu0 %v909, 56
      %v1776 = vpop.permute.xlu0 %1775
      %1777 = vrot.lane.b32.xlu0 %v910, 56
      %v1778 = vpop.permute.xlu0 %1777
      %1779 = vrot.lane.b32.xlu0 %v911, 56
      %v1780 = vpop.permute.xlu0 %1779
      %1781 = vrot.lane.b32.xlu0 %v912, 56
      %v1782 = vpop.permute.xlu0 %1781
      %1783 = vrot.lane.b32.xlu0 %v913, 56
      %v1784 = vpop.permute.xlu0 %1783
      %1785 = vrot.lane.b32.xlu0 %v914, 56
      %v1786 = vpop.permute.xlu0 %1785
      %1787 = vrot.lane.b32.xlu0 %v915, 56
      %v1788 = vpop.permute.xlu0 %1787
      %1789 = vrot.lane.b32.xlu0 %v916, 56
      %v1790 = vpop.permute.xlu0 %1789
      %1791 = vrot.lane.b32.xlu0 %v917, 56
      %v1792 = vpop.permute.xlu0 %1791
      %1793 = vrot.lane.b32.xlu0 %v918, 56
      %v1794 = vpop.permute.xlu0 %1793
      %1795 = vrot.lane.b32.xlu0 %v919, 56
      %v1796 = vpop.permute.xlu0 %1795
      %1797 = vrot.lane.b32.xlu0 %v920, 56
      %v1798 = vpop.permute.xlu0 %1797
      %1799 = vrot.lane.b32.xlu0 %v921, 56
      %v1800 = vpop.permute.xlu0 %1799
      %1801 = vrot.lane.b32.xlu0 %v922, 56
      %v1802 = vpop.permute.xlu0 %1801
      %1803 = vrot.lane.b32.xlu0 %v923, 56
      %v1804 = vpop.permute.xlu0 %1803
      %1805 = vrot.lane.b32.xlu0 %v924, 56
      %v1806 = vpop.permute.xlu0 %1805
      %1807 = vrot.lane.b32.xlu0 %v925, 56
      %v1808 = vpop.permute.xlu0 %1807
      %1809 = vrot.lane.b32.xlu0 %v926, 56
      %v1810 = vpop.permute.xlu0 %1809
      %1811 = vrot.lane.b32.xlu0 %v927, 56
      %v1812 = vpop.permute.xlu0 %1811
      %1813 = vrot.lane.b32.xlu0 %v928, 56
      %v1814 = vpop.permute.xlu0 %1813
      %1815 = vrot.lane.b32.xlu0 %v929, 56
      %v1816 = vpop.permute.xlu0 %1815
      %1817 = vrot.lane.b32.xlu0 %v930, 56
      %v1818 = vpop.permute.xlu0 %1817
      %1819 = vrot.lane.b32.xlu0 %v931, 56
      %v1820 = vpop.permute.xlu0 %1819
      %1821 = vrot.lane.b32.xlu0 %v932, 56
      %v1822 = vpop.permute.xlu0 %1821
      %1823 = vrot.lane.b32.xlu0 %v933, 56
      %v1824 = vpop.permute.xlu0 %1823
      %1825 = vrot.lane.b32.xlu0 %v934, 56
      %v1826 = vpop.permute.xlu0 %1825
      %1827 = vrot.lane.b32.xlu0 %v935, 56
      %v1828 = vpop.permute.xlu0 %1827
      %1829 = vrot.lane.b32.xlu0 %v936, 56
      %v1830 = vpop.permute.xlu0 %1829
      %1831 = vrot.lane.b32.xlu0 %v937, 56
      %v1832 = vpop.permute.xlu0 %1831
      %1833 = vrot.lane.b32.xlu0 %v938, 56
      %v1834 = vpop.permute.xlu0 %1833
      %1899 = vrot.lane.b32.xlu0 %v939, 64
      %v1900 = vpop.permute.xlu0 %1899
      %1901 = vrot.lane.b32.xlu0 %v940, 64
      %v1902 = vpop.permute.xlu0 %1901
      %1903 = vrot.lane.b32.xlu0 %v941, 64
      %v1904 = vpop.permute.xlu0 %1903
      %1905 = vrot.lane.b32.xlu0 %v942, 64
      %v1906 = vpop.permute.xlu0 %1905
      %1907 = vrot.lane.b32.xlu0 %v943, 64
      %v1908 = vpop.permute.xlu0 %1907
      %1909 = vrot.lane.b32.xlu0 %v944, 64
      %v1910 = vpop.permute.xlu0 %1909
      %1911 = vrot.lane.b32.xlu0 %v945, 64
      %v1912 = vpop.permute.xlu0 %1911
      %1913 = vrot.lane.b32.xlu0 %v946, 64
      %v1914 = vpop.permute.xlu0 %1913
      %1915 = vrot.lane.b32.xlu0 %v947, 64
      %v1916 = vpop.permute.xlu0 %1915
      %1917 = vrot.lane.b32.xlu0 %v948, 64
      %v1918 = vpop.permute.xlu0 %1917
      %1919 = vrot.lane.b32.xlu0 %v949, 64
      %v1920 = vpop.permute.xlu0 %1919
      %1921 = vrot.lane.b32.xlu0 %v950, 64
      %v1922 = vpop.permute.xlu0 %1921
      %1923 = vrot.lane.b32.xlu0 %v951, 64
      %v1924 = vpop.permute.xlu0 %1923
      %1925 = vrot.lane.b32.xlu0 %v952, 64
      %v1926 = vpop.permute.xlu0 %1925
      %1927 = vrot.lane.b32.xlu0 %v953, 64
      %v1928 = vpop.permute.xlu0 %1927
      %1929 = vrot.lane.b32.xlu0 %v954, 64
      %v1930 = vpop.permute.xlu0 %1929
      %1931 = vrot.lane.b32.xlu0 %v955, 64
      %v1932 = vpop.permute.xlu0 %1931
      %1933 = vrot.lane.b32.xlu0 %v956, 64
      %v1934 = vpop.permute.xlu0 %1933
      %1935 = vrot.lane.b32.xlu0 %v957, 64
      %v1936 = vpop.permute.xlu0 %1935
      %1937 = vrot.lane.b32.xlu0 %v958, 64
      %v1938 = vpop.permute.xlu0 %1937
      %1939 = vrot.lane.b32.xlu0 %v959, 64
      %v1940 = vpop.permute.xlu0 %1939
      %1941 = vrot.lane.b32.xlu0 %v960, 64
      %v1942 = vpop.permute.xlu0 %1941
      %1943 = vrot.lane.b32.xlu0 %v961, 64
      %v1944 = vpop.permute.xlu0 %1943
      %1945 = vrot.lane.b32.xlu0 %v962, 64
      %v1946 = vpop.permute.xlu0 %1945
      %1947 = vrot.lane.b32.xlu0 %v963, 64
      %v1948 = vpop.permute.xlu0 %1947
      %1949 = vrot.lane.b32.xlu0 %v964, 64
      %v1950 = vpop.permute.xlu0 %1949
      %1951 = vrot.lane.b32.xlu0 %v965, 64
      %v1952 = vpop.permute.xlu0 %1951
      %1953 = vrot.lane.b32.xlu0 %v966, 64
      %v1954 = vpop.permute.xlu0 %1953
      %1955 = vrot.lane.b32.xlu0 %v967, 64
      %v1956 = vpop.permute.xlu0 %1955
      %1957 = vrot.lane.b32.xlu0 %v968, 64
      %v1958 = vpop.permute.xlu0 %1957
      %1959 = vrot.lane.b32.xlu0 %v969, 64
      %v1960 = vpop.permute.xlu0 %1959
      %1961 = vrot.lane.b32.xlu0 %v970, 64
      %v1962 = vpop.permute.xlu0 %1961
      %v1995 = vsel %vm593, %v682, %v1004
      %v1996 = vsel %vm593, %v683, %v1006
      %v1997 = vsel %vm593, %v684, %v1008
      %v1998 = vsel %vm593, %v685, %v1010
      %v1999 = vsel %vm593, %v686, %v1012
      %v2000 = vsel %vm593, %v687, %v1014
      %v2001 = vsel %vm593, %v688, %v1016
      %v2002 = vsel %vm593, %v689, %v1018
      %v2003 = vsel %vm593, %v690, %v1020
      %v2004 = vsel %vm593, %v691, %v1022
      %v2005 = vsel %vm593, %v692, %v1024
      %v2006 = vsel %vm593, %v693, %v1026
      %v2007 = vsel %vm593, %v694, %v1028
      %v2008 = vsel %vm593, %v695, %v1030
      %v2009 = vsel %vm593, %v696, %v1032
      %v2010 = vsel %vm593, %v697, %v1034
      %v2011 = vsel %vm593, %v698, %v1036
      %v2012 = vsel %vm593, %v699, %v1038
      %v2013 = vsel %vm593, %v700, %v1040
      %v2014 = vsel %vm593, %v701, %v1042
      %v2015 = vsel %vm593, %v702, %v1044
      %v2016 = vsel %vm593, %v703, %v1046
      %v2017 = vsel %vm593, %v704, %v1048
      %v2018 = vsel %vm593, %v705, %v1050
      %v2019 = vsel %vm593, %v706, %v1052
      %v2020 = vsel %vm593, %v707, %v1054
      %v2021 = vsel %vm593, %v708, %v1056
      %v2022 = vsel %vm593, %v709, %v1058
      %v2023 = vsel %vm593, %v710, %v1060
      %v2024 = vsel %vm593, %v711, %v1062
      %v2025 = vsel %vm593, %v712, %v1064
      %v2026 = vsel %vm593, %v713, %v1066
      %vm2027 = vcmask 130048
      %v2028 = vsel %vm2027, %v1995, %v1132
      %v2029 = vsel %vm2027, %v1996, %v1134
      %v2030 = vsel %vm2027, %v1997, %v1136
      %v2031 = vsel %vm2027, %v1998, %v1138
      %v2032 = vsel %vm2027, %v1999, %v1140
      %v2033 = vsel %vm2027, %v2000, %v1142
      %v2034 = vsel %vm2027, %v2001, %v1144
      %v2035 = vsel %vm2027, %v2002, %v1146
      %v2036 = vsel %vm2027, %v2003, %v1148
      %v2037 = vsel %vm2027, %v2004, %v1150
      %v2038 = vsel %vm2027, %v2005, %v1152
      %v2039 = vsel %vm2027, %v2006, %v1154
      %v2040 = vsel %vm2027, %v2007, %v1156
      %v2041 = vsel %vm2027, %v2008, %v1158
      %v2042 = vsel %vm2027, %v2009, %v1160
      %v2043 = vsel %vm2027, %v2010, %v1162
      %v2044 = vsel %vm2027, %v2011, %v1164
      %v2045 = vsel %vm2027, %v2012, %v1166
      %v2046 = vsel %vm2027, %v2013, %v1168
      %v2047 = vsel %vm2027, %v2014, %v1170
      %v2048 = vsel %vm2027, %v2015, %v1172
      %v2049 = vsel %vm2027, %v2016, %v1174
      %v2050 = vsel %vm2027, %v2017, %v1176
      %v2051 = vsel %vm2027, %v2018, %v1178
      %v2052 = vsel %vm2027, %v2019, %v1180
      %v2053 = vsel %vm2027, %v2020, %v1182
      %v2054 = vsel %vm2027, %v2021, %v1184
      %v2055 = vsel %vm2027, %v2022, %v1186
      %v2056 = vsel %vm2027, %v2023, %v1188
      %v2057 = vsel %vm2027, %v2024, %v1190
      %v2058 = vsel %vm2027, %v2025, %v1192
      %v2059 = vsel %vm2027, %v2026, %v1194
      %vm2060 = vcmask 195584
      %v2061 = vsel %vm2060, %v2028, %v1260
      %v2062 = vsel %vm2060, %v2029, %v1262
      %v2063 = vsel %vm2060, %v2030, %v1264
      %v2064 = vsel %vm2060, %v2031, %v1266
      %v2065 = vsel %vm2060, %v2032, %v1268
      %v2066 = vsel %vm2060, %v2033, %v1270
      %v2067 = vsel %vm2060, %v2034, %v1272
      %v2068 = vsel %vm2060, %v2035, %v1274
      %v2069 = vsel %vm2060, %v2036, %v1276
      %v2070 = vsel %vm2060, %v2037, %v1278
      %v2071 = vsel %vm2060, %v2038, %v1280
      %v2072 = vsel %vm2060, %v2039, %v1282
      %v2073 = vsel %vm2060, %v2040, %v1284
      %v2074 = vsel %vm2060, %v2041, %v1286
      %v2075 = vsel %vm2060, %v2042, %v1288
      %v2076 = vsel %vm2060, %v2043, %v1290
      %v2077 = vsel %vm2060, %v2044, %v1292
      %v2078 = vsel %vm2060, %v2045, %v1294
      %v2079 = vsel %vm2060, %v2046, %v1296
      %v2080 = vsel %vm2060, %v2047, %v1298
      %v2081 = vsel %vm2060, %v2048, %v1300
      %v2082 = vsel %vm2060, %v2049, %v1302
      %v2083 = vsel %vm2060, %v2050, %v1304
      %v2084 = vsel %vm2060, %v2051, %v1306
      %v2085 = vsel %vm2060, %v2052, %v1308
      %v2086 = vsel %vm2060, %v2053, %v1310
      %v2087 = vsel %vm2060, %v2054, %v1312
      %v2088 = vsel %vm2060, %v2055, %v1314
      %v2089 = vsel %vm2060, %v2056, %v1316
      %v2090 = vsel %vm2060, %v2057, %v1318
      %v2091 = vsel %vm2060, %v2058, %v1320
      %v2092 = vsel %vm2060, %v2059, %v1322
      %v2093 = vsel %vm351, %v2061, %v1388
      %v2094 = vsel %vm351, %v2062, %v1390
      %v2095 = vsel %vm351, %v2063, %v1392
      %v2096 = vsel %vm351, %v2064, %v1394
      %v2097 = vsel %vm351, %v2065, %v1396
      %v2098 = vsel %vm351, %v2066, %v1398
      %v2099 = vsel %vm351, %v2067, %v1400
      %v2100 = vsel %vm351, %v2068, %v1402
      %v2101 = vsel %vm351, %v2069, %v1404
      %v2102 = vsel %vm351, %v2070, %v1406
      %v2103 = vsel %vm351, %v2071, %v1408
      %v2104 = vsel %vm351, %v2072, %v1410
      %v2105 = vsel %vm351, %v2073, %v1412
      %v2106 = vsel %vm351, %v2074, %v1414
      %v2107 = vsel %vm351, %v2075, %v1416
      %v2108 = vsel %vm351, %v2076, %v1418
      %v2109 = vsel %vm351, %v2077, %v1420
      %v2110 = vsel %vm351, %v2078, %v1422
      %v2111 = vsel %vm351, %v2079, %v1424
      %v2112 = vsel %vm351, %v2080, %v1426
      %v2113 = vsel %vm351, %v2081, %v1428
      %v2114 = vsel %vm351, %v2082, %v1430
      %v2115 = vsel %vm351, %v2083, %v1432
      %v2116 = vsel %vm351, %v2084, %v1434
      %v2117 = vsel %vm351, %v2085, %v1436
      %v2118 = vsel %vm351, %v2086, %v1438
      %v2119 = vsel %vm351, %v2087, %v1440
      %v2120 = vsel %vm351, %v2088, %v1442
      %v2121 = vsel %vm351, %v2089, %v1444
      %v2122 = vsel %vm351, %v2090, %v1446
      %v2123 = vsel %vm351, %v2091, %v1448
      %v2124 = vsel %vm351, %v2092, %v1450
      %vm2125 = vcmask 326656
      %v2126 = vsel %vm2125, %v2093, %v1516
      %v2127 = vsel %vm2125, %v2094, %v1518
      %v2128 = vsel %vm2125, %v2095, %v1520
      %v2129 = vsel %vm2125, %v2096, %v1522
      %v2130 = vsel %vm2125, %v2097, %v1524
      %v2131 = vsel %vm2125, %v2098, %v1526
      %v2132 = vsel %vm2125, %v2099, %v1528
      %v2133 = vsel %vm2125, %v2100, %v1530
      %v2134 = vsel %vm2125, %v2101, %v1532
      %v2135 = vsel %vm2125, %v2102, %v1534
      %v2136 = vsel %vm2125, %v2103, %v1536
      %v2137 = vsel %vm2125, %v2104, %v1538
      %v2138 = vsel %vm2125, %v2105, %v1540
      %v2139 = vsel %vm2125, %v2106, %v1542
      %v2140 = vsel %vm2125, %v2107, %v1544
      %v2141 = vsel %vm2125, %v2108, %v1546
      %v2142 = vsel %vm2125, %v2109, %v1548
      %v2143 = vsel %vm2125, %v2110, %v1550
      %v2144 = vsel %vm2125, %v2111, %v1552
      %v2145 = vsel %vm2125, %v2112, %v1554
      %v2146 = vsel %vm2125, %v2113, %v1556
      %v2147 = vsel %vm2125, %v2114, %v1558
      %v2148 = vsel %vm2125, %v2115, %v1560
      %v2149 = vsel %vm2125, %v2116, %v1562
      %v2150 = vsel %vm2125, %v2117, %v1564
      %v2151 = vsel %vm2125, %v2118, %v1566
      %v2152 = vsel %vm2125, %v2119, %v1568
      %v2153 = vsel %vm2125, %v2120, %v1570
      %v2154 = vsel %vm2125, %v2121, %v1572
      %v2155 = vsel %vm2125, %v2122, %v1574
      %v2156 = vsel %vm2125, %v2123, %v1576
      %v2157 = vsel %vm2125, %v2124, %v1578
      %vm2158 = vcmask 392192
      %v2159 = vsel %vm2158, %v2126, %v1644
      %v2160 = vsel %vm2158, %v2127, %v1646
      %v2161 = vsel %vm2158, %v2128, %v1648
      %v2162 = vsel %vm2158, %v2129, %v1650
      %v2163 = vsel %vm2158, %v2130, %v1652
      %v2164 = vsel %vm2158, %v2131, %v1654
      %v2165 = vsel %vm2158, %v2132, %v1656
      %v2166 = vsel %vm2158, %v2133, %v1658
      %v2167 = vsel %vm2158, %v2134, %v1660
      %v2168 = vsel %vm2158, %v2135, %v1662
      %v2169 = vsel %vm2158, %v2136, %v1664
      %v2170 = vsel %vm2158, %v2137, %v1666
      %v2171 = vsel %vm2158, %v2138, %v1668
      %v2172 = vsel %vm2158, %v2139, %v1670
      %v2173 = vsel %vm2158, %v2140, %v1672
      %v2174 = vsel %vm2158, %v2141, %v1674
      %v2175 = vsel %vm2158, %v2142, %v1676
      %v2176 = vsel %vm2158, %v2143, %v1678
      %v2177 = vsel %vm2158, %v2144, %v1680
      %v2178 = vsel %vm2158, %v2145, %v1682
      %v2179 = vsel %vm2158, %v2146, %v1684
      %v2180 = vsel %vm2158, %v2147, %v1686
      %v2181 = vsel %vm2158, %v2148, %v1688
      %v2182 = vsel %vm2158, %v2149, %v1690
      %v2183 = vsel %vm2158, %v2150, %v1692
      %v2184 = vsel %vm2158, %v2151, %v1694
      %v2185 = vsel %vm2158, %v2152, %v1696
      %v2186 = vsel %vm2158, %v2153, %v1698
      %v2187 = vsel %vm2158, %v2154, %v1700
      %v2188 = vsel %vm2158, %v2155, %v1702
      %v2189 = vsel %vm2158, %v2156, %v1704
      %v2190 = vsel %vm2158, %v2157, %v1706
      %vm2191 = vcmask 457728
      %v2192 = vsel %vm2191, %v2159, %v1772
      %v2193 = vsel %vm2191, %v2160, %v1774
      %v2194 = vsel %vm2191, %v2161, %v1776
      %v2195 = vsel %vm2191, %v2162, %v1778
      %v2196 = vsel %vm2191, %v2163, %v1780
      %v2197 = vsel %vm2191, %v2164, %v1782
      %v2198 = vsel %vm2191, %v2165, %v1784
      %v2199 = vsel %vm2191, %v2166, %v1786
      %v2200 = vsel %vm2191, %v2167, %v1788
      %v2201 = vsel %vm2191, %v2168, %v1790
      %v2202 = vsel %vm2191, %v2169, %v1792
      %v2203 = vsel %vm2191, %v2170, %v1794
      %v2204 = vsel %vm2191, %v2171, %v1796
      %v2205 = vsel %vm2191, %v2172, %v1798
      %v2206 = vsel %vm2191, %v2173, %v1800
      %v2207 = vsel %vm2191, %v2174, %v1802
      %v2208 = vsel %vm2191, %v2175, %v1804
      %v2209 = vsel %vm2191, %v2176, %v1806
      %v2210 = vsel %vm2191, %v2177, %v1808
      %v2211 = vsel %vm2191, %v2178, %v1810
      %v2212 = vsel %vm2191, %v2179, %v1812
      %v2213 = vsel %vm2191, %v2180, %v1814
      %v2214 = vsel %vm2191, %v2181, %v1816
      %v2215 = vsel %vm2191, %v2182, %v1818
      %v2216 = vsel %vm2191, %v2183, %v1820
      %v2217 = vsel %vm2191, %v2184, %v1822
      %v2218 = vsel %vm2191, %v2185, %v1824
      %v2219 = vsel %vm2191, %v2186, %v1826
      %v2220 = vsel %vm2191, %v2187, %v1828
      %v2221 = vsel %vm2191, %v2188, %v1830
      %v2222 = vsel %vm2191, %v2189, %v1832
      %v2223 = vsel %vm2191, %v2190, %v1834
      %vm2224 = vcmask 523264
      %v2225 = vsel %vm2224, %v2192, %v1900
      %v2226 = vsel %vm2224, %v2193, %v1902
      %v2227 = vsel %vm2224, %v2194, %v1904
      %v2228 = vsel %vm2224, %v2195, %v1906
      %v2229 = vsel %vm2224, %v2196, %v1908
      %v2230 = vsel %vm2224, %v2197, %v1910
      %v2231 = vsel %vm2224, %v2198, %v1912
      %v2232 = vsel %vm2224, %v2199, %v1914
      %v2233 = vsel %vm2224, %v2200, %v1916
      %v2234 = vsel %vm2224, %v2201, %v1918
      %v2235 = vsel %vm2224, %v2202, %v1920
      %v2236 = vsel %vm2224, %v2203, %v1922
      %v2237 = vsel %vm2224, %v2204, %v1924
      %v2238 = vsel %vm2224, %v2205, %v1926
      %v2239 = vsel %vm2224, %v2206, %v1928
      %v2240 = vsel %vm2224, %v2207, %v1930
      %v2241 = vsel %vm2224, %v2208, %v1932
      %v2242 = vsel %vm2224, %v2209, %v1934
      %v2243 = vsel %vm2224, %v2210, %v1936
      %v2244 = vsel %vm2224, %v2211, %v1938
      %v2245 = vsel %vm2224, %v2212, %v1940
      %v2246 = vsel %vm2224, %v2213, %v1942
      %v2247 = vsel %vm2224, %v2214, %v1944
      %v2248 = vsel %vm2224, %v2215, %v1946
      %v2249 = vsel %vm2224, %v2216, %v1948
      %v2250 = vsel %vm2224, %v2217, %v1950
      %v2251 = vsel %vm2224, %v2218, %v1952
      %v2252 = vsel %vm2224, %v2219, %v1954
      %v2253 = vsel %vm2224, %v2220, %v1956
      %v2254 = vsel %vm2224, %v2221, %v1958
      %v2255 = vsel %vm2224, %v2222, %v1960
      %v2256 = vsel %vm2224, %v2223, %v1962
      %v2257 = vpack.c.bf16 %v2226, %v2225
      %v2258 = vpack.c.bf16 %v2228, %v2227
      %v2259 = vpack.c.bf16 %v2230, %v2229
      %v2260 = vpack.c.bf16 %v2232, %v2231
      %v2261 = vpack.c.bf16 %v2234, %v2233
      %v2262 = vpack.c.bf16 %v2236, %v2235
      %v2263 = vpack.c.bf16 %v2238, %v2237
      %v2264 = vpack.c.bf16 %v2240, %v2239
      %v2265 = vpack.c.bf16 %v2242, %v2241
      %v2266 = vpack.c.bf16 %v2244, %v2243
      %v2267 = vpack.c.bf16 %v2246, %v2245
      %v2268 = vpack.c.bf16 %v2248, %v2247
      %v2269 = vpack.c.bf16 %v2250, %v2249
      %v2270 = vpack.c.bf16 %v2252, %v2251
      %v2271 = vpack.c.bf16 %v2254, %v2253
      %v2272 = vpack.c.bf16 %v2256, %v2255
      %v2273 = vld [vmem:[%s3] sm:$0xf]
      %v2274 = vld [vmem:[%s3 + $0x4] sm:$0xf]
      %v2275 = vld [vmem:[%s3 + $0x8] sm:$0xf]
      %v2276 = vld [vmem:[%s3 + $0xc] sm:$0xf]
      %v2277 = vld [vmem:[%s3 + $0x10] sm:$0xf]
      %v2278 = vld [vmem:[%s3 + $0x14] sm:$0xf]
      %v2279 = vld [vmem:[%s3 + $0x18] sm:$0xf]
      %v2280 = vld [vmem:[%s3 + $0x1c] sm:$0xf]
      %v2281 = vld [vmem:[%s3 + $0x20] sm:$0xf]
      %v2282 = vld [vmem:[%s4] sm:$0x1]
      %v2284 = vlaneseq
      %v2285 = vshrl.u32 %v2284, 7
      %v2286 = vsub.s32 0, %v2285
      %v2287 = vrot.slane %v2282, %v2286
      %v2298 = vunpack.c.l.b16 %v2273
      %v2299 = vunpack.c.l.b16 %v2274
      %v2300 = vunpack.c.l.b16 %v2275
      %v2301 = vunpack.c.l.b16 %v2276
      %v2302 = vunpack.c.l.b16 %v2277
      %v2303 = vunpack.c.l.b16 %v2278
      %v2304 = vunpack.c.l.b16 %v2279
      %v2305 = vunpack.c.l.b16 %v2280
      %v2306 = vunpack.c.l.b16 %v2281
      %v2307 = vpack.c.b16 %v2299, %v2298
      %v2308 = vpack.c.b16 %v2301, %v2300
      %v2309 = vpack.c.b16 %v2303, %v2302
      %v2310 = vpack.c.b16 %v2305, %v2304
      %v2311 = vpack.c.b16 %v2306, %v2306
      %vm2316 = vcmask 588800
      %v2318 = vsel %vm2316, %v2257, 0
      %v2321 = vsel %vm2316, %v2258, 0
      %v2324 = vsel %vm2316, %v2259, 0
      %v2327 = vsel %vm2316, %v2260, 0
      %v2330 = vsel %vm2316, %v2261, 0
      %v2333 = vsel %vm2316, %v2262, 0
      %v2336 = vsel %vm2316, %v2263, 0
      %v2339 = vsel %vm2316, %v2264, 0
      %v2342 = vsel %vm2316, %v2265, 0
      %v2345 = vsel %vm2316, %v2266, 0
      %v2348 = vsel %vm2316, %v2267, 0
      %v2351 = vsel %vm2316, %v2268, 0
      %v2354 = vsel %vm2316, %v2269, 0
      %v2357 = vsel %vm2316, %v2270, 0
      %v2360 = vsel %vm2316, %v2271, 0
      %v2363 = vsel %vm2316, %v2272, 0
      %vm2365 = vcmask 1043456
      %v2367 = vsel %vm2365, %v2311, 0
      %2369 = vmatprep.subr.bf16.mxu0 0
      %2370 = vmatpush1.bf16.msra.mxu0 0
      %2371 = vmatprep.subr.bf16.mxu0 0
      %2372 = vmatpush1.bf16.msra.mxu0 0
      %2373 = vmatprep.subr.bf16.mxu0 0
      %2374 = vmatpush1.bf16.msra.mxu0 0
      %2375 = vmatprep.subr.bf16.mxu0 0
      %2376 = vmatpush1.bf16.msra.mxu0 %v2367
      %2377 = vmatprep.subr.bf16.mxu0 0
      %2378 = vmatpush1.bf16.msra.mxu0 %v2310
      %2379 = vmatprep.subr.bf16.mxu0 0
      %2380 = vmatpush1.bf16.msra.mxu0 %v2309
      %2381 = vmatprep.subr.bf16.mxu0 0
      %2382 = vmatpush1.bf16.msra.mxu0 %v2308
      %2383 = vmatprep.subr.bf16.mxu0 0
      %2384 = vmatpush1.bf16.msra.mxu0 %v2307
      %2385 = vmatprep.subr.bf16.mxu0 0
      %2386 = vmatpush2.bf16.msra.mxu0 0
      %2387 = vmatprep.subr.bf16.mxu0 0
      %2388 = vmatpush2.bf16.msra.mxu0 0
      %2389 = vmatprep.subr.bf16.mxu0 0
      %2390 = vmatpush2.bf16.msra.mxu0 0
      %2391 = vmatprep.subr.bf16.mxu0 0
      %2392 = vmatpush2.bf16.msra.mxu0 0
      %2393 = vmatprep.subr.bf16.mxu0 0
      %2394 = vmatpush2.bf16.msra.mxu0 0
      %2395 = vmatprep.subr.bf16.mxu0 0
      %2396 = vmatpush2.bf16.msra.mxu0 0
      %2397 = vmatprep.subr.bf16.mxu0 0
      %2398 = vmatpush2.bf16.msra.mxu0 0
      %2399 = vmatprep.subr.bf16.mxu0 0
      %2400 = vmatpush2.bf16.msra.mxu0 0
      %2401 = vmatprep.mubr.bf16.mxu0 0
      %2402 = vmatmul.mubr.bf16.gmra.mxu0 %v2318
      %v2403 = vpop.f32.mrf.mxu0
      %v2404 = vadd.f32 %v2287, %v2403
      %v2405 = vpop.f32.mrf.mxu0
      %v2406 = vpop.f32.mrf.mxu0
      %v2407 = vadd.f32 %v2287, %v2406
      %v2408 = vpop.f32.mrf.mxu0
      %2409 = vmatprep.mubr.bf16.mxu0 0
      %2410 = vmatmul.mubr.bf16.gmra.mxu0 %v2321
      %v2411 = vpop.f32.mrf.mxu0
      %v2412 = vadd.f32 %v2287, %v2411
      %v2413 = vpop.f32.mrf.mxu0
      %v2414 = vpop.f32.mrf.mxu0
      %v2415 = vadd.f32 %v2287, %v2414
      %v2416 = vpop.f32.mrf.mxu0
      %2417 = vmatprep.mubr.bf16.mxu0 0
      %2418 = vmatmul.mubr.bf16.gmra.mxu0 %v2324
      %v2419 = vpop.f32.mrf.mxu0
      %v2420 = vadd.f32 %v2287, %v2419
      %v2421 = vpop.f32.mrf.mxu0
      %v2422 = vpop.f32.mrf.mxu0
      %v2423 = vadd.f32 %v2287, %v2422
      %v2424 = vpop.f32.mrf.mxu0
      %2425 = vmatprep.mubr.bf16.mxu0 0
      %2426 = vmatmul.mubr.bf16.gmra.mxu0 %v2327
      %v2427 = vpop.f32.mrf.mxu0
      %v2428 = vadd.f32 %v2287, %v2427
      %v2429 = vpop.f32.mrf.mxu0
      %v2430 = vpop.f32.mrf.mxu0
      %v2431 = vadd.f32 %v2287, %v2430
      %v2432 = vpop.f32.mrf.mxu0
      %2433 = vmatprep.mubr.bf16.mxu0 0
      %2434 = vmatmul.mubr.bf16.gmra.mxu0 %v2330
      %v2435 = vpop.f32.mrf.mxu0
      %v2436 = vadd.f32 %v2287, %v2435
      %v2437 = vpop.f32.mrf.mxu0
      %v2438 = vpop.f32.mrf.mxu0
      %v2439 = vadd.f32 %v2287, %v2438
      %v2440 = vpop.f32.mrf.mxu0
      %2441 = vmatprep.mubr.bf16.mxu0 0
      %2442 = vmatmul.mubr.bf16.gmra.mxu0 %v2333
      %v2443 = vpop.f32.mrf.mxu0
      %v2444 = vadd.f32 %v2287, %v2443
      %v2445 = vpop.f32.mrf.mxu0
      %v2446 = vpop.f32.mrf.mxu0
      %v2447 = vadd.f32 %v2287, %v2446
      %v2448 = vpop.f32.mrf.mxu0
      %2449 = vmatprep.mubr.bf16.mxu0 0
      %2450 = vmatmul.mubr.bf16.gmra.mxu0 %v2336
      %v2451 = vpop.f32.mrf.mxu0
      %v2452 = vadd.f32 %v2287, %v2451
      %v2453 = vpop.f32.mrf.mxu0
      %v2454 = vpop.f32.mrf.mxu0
      %v2455 = vadd.f32 %v2287, %v2454
      %v2456 = vpop.f32.mrf.mxu0
      %2457 = vmatprep.mubr.bf16.mxu0 0
      %2458 = vmatmul.mubr.bf16.gmra.mxu0 %v2339
      %v2459 = vpop.f32.mrf.mxu0
      %v2460 = vadd.f32 %v2287, %v2459
      %v2461 = vpop.f32.mrf.mxu0
      %v2462 = vpop.f32.mrf.mxu0
      %v2463 = vadd.f32 %v2287, %v2462
      %v2464 = vpop.f32.mrf.mxu0
      %2465 = vmatprep.mubr.bf16.mxu0 0
      %2466 = vmatmul.mubr.bf16.gmra.mxu0 %v2342
      %v2467 = vpop.f32.mrf.mxu0
      %v2468 = vadd.f32 %v2287, %v2467
      %v2469 = vpop.f32.mrf.mxu0
      %v2470 = vpop.f32.mrf.mxu0
      %v2471 = vadd.f32 %v2287, %v2470
      %v2472 = vpop.f32.mrf.mxu0
      %2473 = vmatprep.mubr.bf16.mxu0 0
      %2474 = vmatmul.mubr.bf16.gmra.mxu0 %v2345
      %v2475 = vpop.f32.mrf.mxu0
      %v2476 = vadd.f32 %v2287, %v2475
      %v2477 = vpop.f32.mrf.mxu0
      %v2478 = vpop.f32.mrf.mxu0
      %v2479 = vadd.f32 %v2287, %v2478
      %v2480 = vpop.f32.mrf.mxu0
      %2481 = vmatprep.mubr.bf16.mxu0 0
      %2482 = vmatmul.mubr.bf16.gmra.mxu0 %v2348
      %v2483 = vpop.f32.mrf.mxu0
      %v2484 = vadd.f32 %v2287, %v2483
      %v2485 = vpop.f32.mrf.mxu0
      %v2486 = vpop.f32.mrf.mxu0
      %v2487 = vadd.f32 %v2287, %v2486
      %v2488 = vpop.f32.mrf.mxu0
      %2489 = vmatprep.mubr.bf16.mxu0 0
      %2490 = vmatmul.mubr.bf16.gmra.mxu0 %v2351
      %v2491 = vpop.f32.mrf.mxu0
      %v2492 = vadd.f32 %v2287, %v2491
      %v2493 = vpop.f32.mrf.mxu0
      %v2494 = vpop.f32.mrf.mxu0
      %v2495 = vadd.f32 %v2287, %v2494
      %v2496 = vpop.f32.mrf.mxu0
      %2497 = vmatprep.mubr.bf16.mxu0 0
      %2498 = vmatmul.mubr.bf16.gmra.mxu0 %v2354
      %v2499 = vpop.f32.mrf.mxu0
      %v2500 = vadd.f32 %v2287, %v2499
      %v2501 = vpop.f32.mrf.mxu0
      %v2502 = vpop.f32.mrf.mxu0
      %v2503 = vadd.f32 %v2287, %v2502
      %v2504 = vpop.f32.mrf.mxu0
      %2505 = vmatprep.mubr.bf16.mxu0 0
      %2506 = vmatmul.mubr.bf16.gmra.mxu0 %v2357
      %v2507 = vpop.f32.mrf.mxu0
      %v2508 = vadd.f32 %v2287, %v2507
      %v2509 = vpop.f32.mrf.mxu0
      %v2510 = vpop.f32.mrf.mxu0
      %v2511 = vadd.f32 %v2287, %v2510
      %v2512 = vpop.f32.mrf.mxu0
      %2513 = vmatprep.mubr.bf16.mxu0 0
      %2514 = vmatmul.mubr.bf16.gmra.mxu0 %v2360
      %v2515 = vpop.f32.mrf.mxu0
      %v2516 = vadd.f32 %v2287, %v2515
      %v2517 = vpop.f32.mrf.mxu0
      %v2518 = vpop.f32.mrf.mxu0
      %v2519 = vadd.f32 %v2287, %v2518
      %v2520 = vpop.f32.mrf.mxu0
      %2521 = vmatprep.mubr.bf16.mxu0 0
      %2522 = vmatmul.mubr.bf16.gmra.mxu0 %v2363
      %v2523 = vpop.f32.mrf.mxu0
      %v2524 = vadd.f32 %v2287, %v2523
      %v2525 = vpop.f32.mrf.mxu0
      %v2526 = vpop.f32.mrf.mxu0
      %v2527 = vadd.f32 %v2287, %v2526
      %v2528 = vpop.f32.mrf.mxu0
      %2529 = vdwg.mxu0
      %v2530 = vmax.f32 %v2404, 0.0
      %v2531 = vmax.f32 %v2407, 0.0
      %v2532 = vmax.f32 %v2412, 0.0
      %v2533 = vmax.f32 %v2415, 0.0
      %v2534 = vmax.f32 %v2420, 0.0
      %v2535 = vmax.f32 %v2423, 0.0
      %v2536 = vmax.f32 %v2428, 0.0
      %v2537 = vmax.f32 %v2431, 0.0
      %v2538 = vmax.f32 %v2436, 0.0
      %v2539 = vmax.f32 %v2439, 0.0
      %v2540 = vmax.f32 %v2444, 0.0
      %v2541 = vmax.f32 %v2447, 0.0
      %v2542 = vmax.f32 %v2452, 0.0
      %v2543 = vmax.f32 %v2455, 0.0
      %v2544 = vmax.f32 %v2460, 0.0
      %v2545 = vmax.f32 %v2463, 0.0
      %v2546 = vmax.f32 %v2468, 0.0
      %v2547 = vmax.f32 %v2471, 0.0
      %v2548 = vmax.f32 %v2476, 0.0
      %v2549 = vmax.f32 %v2479, 0.0
      %v2550 = vmax.f32 %v2484, 0.0
      %v2551 = vmax.f32 %v2487, 0.0
      %v2552 = vmax.f32 %v2492, 0.0
      %v2553 = vmax.f32 %v2495, 0.0
      %v2554 = vmax.f32 %v2500, 0.0
      %v2555 = vmax.f32 %v2503, 0.0
      %v2556 = vmax.f32 %v2508, 0.0
      %v2557 = vmax.f32 %v2511, 0.0
      %v2558 = vmax.f32 %v2516, 0.0
      %v2559 = vmax.f32 %v2519, 0.0
      %v2560 = vmax.f32 %v2524, 0.0
      %v2561 = vmax.f32 %v2527, 0.0
      %v2562 = vpack.c.bf16 %v2531, %v2530
      %v2563 = vpack.c.bf16 %v2533, %v2532
      %v2564 = vpack.c.bf16 %v2535, %v2534
      %v2565 = vpack.c.bf16 %v2537, %v2536
      %v2566 = vpack.c.bf16 %v2539, %v2538
      %v2567 = vpack.c.bf16 %v2541, %v2540
      %v2568 = vpack.c.bf16 %v2543, %v2542
      %v2569 = vpack.c.bf16 %v2545, %v2544
      %v2570 = vpack.c.bf16 %v2547, %v2546
      %v2571 = vpack.c.bf16 %v2549, %v2548
      %v2572 = vpack.c.bf16 %v2551, %v2550
      %v2573 = vpack.c.bf16 %v2553, %v2552
      %v2574 = vpack.c.bf16 %v2555, %v2554
      %v2575 = vpack.c.bf16 %v2557, %v2556
      %v2576 = vpack.c.bf16 %v2559, %v2558
      %v2577 = vpack.c.bf16 %v2561, %v2560
      %v2578 = vld [vmem:[%s5] sm:$0xf]
      %v2579 = vld [vmem:[%s6] sm:$0x1]
      %v2581 = vlaneseq
      %v2582 = vshrl.u32 %v2581, 7
      %v2583 = vsub.s32 0, %v2582
      %v2584 = vrot.slane %v2579, %v2583
      %v2587 = vsel %vm593, %v2562, 0
      %v2590 = vsel %vm593, %v2563, 0
      %v2593 = vsel %vm593, %v2564, 0
      %v2596 = vsel %vm593, %v2565, 0
      %v2599 = vsel %vm593, %v2566, 0
      %v2602 = vsel %vm593, %v2567, 0
      %v2605 = vsel %vm593, %v2568, 0
      %v2608 = vsel %vm593, %v2569, 0
      %v2611 = vsel %vm593, %v2570, 0
      %v2614 = vsel %vm593, %v2571, 0
      %v2617 = vsel %vm593, %v2572, 0
      %v2620 = vsel %vm593, %v2573, 0
      %v2623 = vsel %vm593, %v2574, 0
      %v2626 = vsel %vm593, %v2575, 0
      %v2629 = vsel %vm593, %v2576, 0
      %v2632 = vsel %vm593, %v2577, 0
      %v2635 = vsel %vm2365, %v2578, 0
      %2637 = vmatprep.subr.bf16.mxu0 0
      %2638 = vmatpush1.bf16.msra.mxu0 0
      %2639 = vmatprep.subr.bf16.mxu0 0
      %2640 = vmatpush1.bf16.msra.mxu0 0
      %2641 = vmatprep.subr.bf16.mxu0 0
      %2642 = vmatpush1.bf16.msra.mxu0 0
      %2643 = vmatprep.subr.bf16.mxu0 0
      %2644 = vmatpush1.bf16.msra.mxu0 0
      %2645 = vmatprep.subr.bf16.mxu0 0
      %2646 = vmatpush1.bf16.msra.mxu0 0
      %2647 = vmatprep.subr.bf16.mxu0 0
      %2648 = vmatpush1.bf16.msra.mxu0 0
      %2649 = vmatprep.subr.bf16.mxu0 0
      %2650 = vmatpush1.bf16.msra.mxu0 0
      %2651 = vmatprep.subr.bf16.mxu0 0
      %2652 = vmatpush1.bf16.msra.mxu0 %v2635
      %2653 = vmatprep.subr.bf16.mxu0 0
      %2654 = vmatpush2.bf16.msra.mxu0 0
      %2655 = vmatprep.subr.bf16.mxu0 0
      %2656 = vmatpush2.bf16.msra.mxu0 0
      %2657 = vmatprep.subr.bf16.mxu0 0
      %2658 = vmatpush2.bf16.msra.mxu0 0
      %2659 = vmatprep.subr.bf16.mxu0 0
      %2660 = vmatpush2.bf16.msra.mxu0 0
      %2661 = vmatprep.subr.bf16.mxu0 0
      %2662 = vmatpush2.bf16.msra.mxu0 0
      %2663 = vmatprep.subr.bf16.mxu0 0
      %2664 = vmatpush2.bf16.msra.mxu0 0
      %2665 = vmatprep.subr.bf16.mxu0 0
      %2666 = vmatpush2.bf16.msra.mxu0 0
      %2667 = vmatprep.subr.bf16.mxu0 0
      %2668 = vmatpush2.bf16.msra.mxu0 0
      %2669 = vmatprep.mubr.bf16.mxu0 0
      %2670 = vmatmul.mubr.bf16.gmra.mxu0 %v2587
      %v2671 = vpop.f32.mrf.mxu0
      %v2672 = vadd.f32 %v2584, %v2671
      %v2673 = vpop.f32.mrf.mxu0
      %v2674 = vpop.f32.mrf.mxu0
      %v2675 = vadd.f32 %v2584, %v2674
      %v2676 = vpop.f32.mrf.mxu0
      %2677 = vmatprep.mubr.bf16.mxu0 0
      %2678 = vmatmul.mubr.bf16.gmra.mxu0 %v2590
      %v2679 = vpop.f32.mrf.mxu0
      %v2680 = vadd.f32 %v2584, %v2679
      %v2681 = vpop.f32.mrf.mxu0
      %v2682 = vpop.f32.mrf.mxu0
      %v2683 = vadd.f32 %v2584, %v2682
      %v2684 = vpop.f32.mrf.mxu0
      %2685 = vmatprep.mubr.bf16.mxu0 0
      %2686 = vmatmul.mubr.bf16.gmra.mxu0 %v2593
      %v2687 = vpop.f32.mrf.mxu0
      %v2688 = vadd.f32 %v2584, %v2687
      %v2689 = vpop.f32.mrf.mxu0
      %v2690 = vpop.f32.mrf.mxu0
      %v2691 = vadd.f32 %v2584, %v2690
      %v2692 = vpop.f32.mrf.mxu0
      %2693 = vmatprep.mubr.bf16.mxu0 0
      %2694 = vmatmul.mubr.bf16.gmra.mxu0 %v2596
      %v2695 = vpop.f32.mrf.mxu0
      %v2696 = vadd.f32 %v2584, %v2695
      %v2697 = vpop.f32.mrf.mxu0
      %v2698 = vpop.f32.mrf.mxu0
      %v2699 = vadd.f32 %v2584, %v2698
      %v2700 = vpop.f32.mrf.mxu0
      %2701 = vmatprep.mubr.bf16.mxu0 0
      %2702 = vmatmul.mubr.bf16.gmra.mxu0 %v2599
      %v2703 = vpop.f32.mrf.mxu0
      %v2704 = vadd.f32 %v2584, %v2703
      %v2705 = vpop.f32.mrf.mxu0
      %v2706 = vpop.f32.mrf.mxu0
      %v2707 = vadd.f32 %v2584, %v2706
      %v2708 = vpop.f32.mrf.mxu0
      %2709 = vmatprep.mubr.bf16.mxu0 0
      %2710 = vmatmul.mubr.bf16.gmra.mxu0 %v2602
      %v2711 = vpop.f32.mrf.mxu0
      %v2712 = vadd.f32 %v2584, %v2711
      %v2713 = vpop.f32.mrf.mxu0
      %v2714 = vpop.f32.mrf.mxu0
      %v2715 = vadd.f32 %v2584, %v2714
      %v2716 = vpop.f32.mrf.mxu0
      %2717 = vmatprep.mubr.bf16.mxu0 0
      %2718 = vmatmul.mubr.bf16.gmra.mxu0 %v2605
      %v2719 = vpop.f32.mrf.mxu0
      %v2720 = vadd.f32 %v2584, %v2719
      %v2721 = vpop.f32.mrf.mxu0
      %v2722 = vpop.f32.mrf.mxu0
      %v2723 = vadd.f32 %v2584, %v2722
      %v2724 = vpop.f32.mrf.mxu0
      %2725 = vmatprep.mubr.bf16.mxu0 0
      %2726 = vmatmul.mubr.bf16.gmra.mxu0 %v2608
      %v2727 = vpop.f32.mrf.mxu0
      %v2728 = vadd.f32 %v2584, %v2727
      %v2729 = vpop.f32.mrf.mxu0
      %v2730 = vpop.f32.mrf.mxu0
      %v2731 = vadd.f32 %v2584, %v2730
      %v2732 = vpop.f32.mrf.mxu0
      %2733 = vmatprep.mubr.bf16.mxu0 0
      %2734 = vmatmul.mubr.bf16.gmra.mxu0 %v2611
      %v2735 = vpop.f32.mrf.mxu0
      %v2736 = vadd.f32 %v2584, %v2735
      %v2737 = vpop.f32.mrf.mxu0
      %v2738 = vpop.f32.mrf.mxu0
      %v2739 = vadd.f32 %v2584, %v2738
      %v2740 = vpop.f32.mrf.mxu0
      %2741 = vmatprep.mubr.bf16.mxu0 0
      %2742 = vmatmul.mubr.bf16.gmra.mxu0 %v2614
      %v2743 = vpop.f32.mrf.mxu0
      %v2744 = vadd.f32 %v2584, %v2743
      %v2745 = vpop.f32.mrf.mxu0
      %v2746 = vpop.f32.mrf.mxu0
      %v2747 = vadd.f32 %v2584, %v2746
      %v2748 = vpop.f32.mrf.mxu0
      %2749 = vmatprep.mubr.bf16.mxu0 0
      %2750 = vmatmul.mubr.bf16.gmra.mxu0 %v2617
      %v2751 = vpop.f32.mrf.mxu0
      %v2752 = vadd.f32 %v2584, %v2751
      %v2753 = vpop.f32.mrf.mxu0
      %v2754 = vpop.f32.mrf.mxu0
      %v2755 = vadd.f32 %v2584, %v2754
      %v2756 = vpop.f32.mrf.mxu0
      %2757 = vmatprep.mubr.bf16.mxu0 0
      %2758 = vmatmul.mubr.bf16.gmra.mxu0 %v2620
      %v2759 = vpop.f32.mrf.mxu0
      %v2760 = vadd.f32 %v2584, %v2759
      %v2761 = vpop.f32.mrf.mxu0
      %v2762 = vpop.f32.mrf.mxu0
      %v2763 = vadd.f32 %v2584, %v2762
      %v2764 = vpop.f32.mrf.mxu0
      %2765 = vmatprep.mubr.bf16.mxu0 0
      %2766 = vmatmul.mubr.bf16.gmra.mxu0 %v2623
      %v2767 = vpop.f32.mrf.mxu0
      %v2768 = vadd.f32 %v2584, %v2767
      %v2769 = vpop.f32.mrf.mxu0
      %v2770 = vpop.f32.mrf.mxu0
      %v2771 = vadd.f32 %v2584, %v2770
      %v2772 = vpop.f32.mrf.mxu0
      %2773 = vmatprep.mubr.bf16.mxu0 0
      %2774 = vmatmul.mubr.bf16.gmra.mxu0 %v2626
      %v2775 = vpop.f32.mrf.mxu0
      %v2776 = vadd.f32 %v2584, %v2775
      %v2777 = vpop.f32.mrf.mxu0
      %v2778 = vpop.f32.mrf.mxu0
      %v2779 = vadd.f32 %v2584, %v2778
      %v2780 = vpop.f32.mrf.mxu0
      %2781 = vmatprep.mubr.bf16.mxu0 0
      %2782 = vmatmul.mubr.bf16.gmra.mxu0 %v2629
      %v2783 = vpop.f32.mrf.mxu0
      %v2784 = vadd.f32 %v2584, %v2783
      %v2785 = vpop.f32.mrf.mxu0
      %v2786 = vpop.f32.mrf.mxu0
      %v2787 = vadd.f32 %v2584, %v2786
      %v2788 = vpop.f32.mrf.mxu0
      %2789 = vmatprep.mubr.bf16.mxu0 0
      %2790 = vmatmul.mubr.bf16.gmra.mxu0 %v2632
      %v2791 = vpop.f32.mrf.mxu0
      %v2792 = vadd.f32 %v2584, %v2791
      %v2793 = vpop.f32.mrf.mxu0
      %v2794 = vpop.f32.mrf.mxu0
      %v2795 = vadd.f32 %v2584, %v2794
      %v2796 = vpop.f32.mrf.mxu0
      %2797 = vdwg.mxu0
      %v2798 = vadd.f32 %v2672, %v280
      %v2799 = vadd.f32 %v2675, %v281
      %v2800 = vadd.f32 %v2680, %v282
      %v2801 = vadd.f32 %v2683, %v283
      %v2802 = vadd.f32 %v2688, %v284
      %v2803 = vadd.f32 %v2691, %v285
      %v2804 = vadd.f32 %v2696, %v286
      %v2805 = vadd.f32 %v2699, %v287
      %v2806 = vadd.f32 %v2704, %v288
      %v2807 = vadd.f32 %v2707, %v289
      %v2808 = vadd.f32 %v2712, %v290
      %v2809 = vadd.f32 %v2715, %v291
      %v2810 = vadd.f32 %v2720, %v292
      %v2811 = vadd.f32 %v2723, %v293
      %v2812 = vadd.f32 %v2728, %v294
      %v2813 = vadd.f32 %v2731, %v295
      %v2814 = vadd.f32 %v2736, %v296
      %v2815 = vadd.f32 %v2739, %v297
      %v2816 = vadd.f32 %v2744, %v298
      %v2817 = vadd.f32 %v2747, %v299
      %v2818 = vadd.f32 %v2752, %v300
      %v2819 = vadd.f32 %v2755, %v301
      %v2820 = vadd.f32 %v2760, %v302
      %v2821 = vadd.f32 %v2763, %v303
      %v2822 = vadd.f32 %v2768, %v304
      %v2823 = vadd.f32 %v2771, %v305
      %v2824 = vadd.f32 %v2776, %v306
      %v2825 = vadd.f32 %v2779, %v307
      %v2826 = vadd.f32 %v2784, %v308
      %v2827 = vadd.f32 %v2787, %v309
      %v2828 = vadd.f32 %v2792, %v310
      %v2829 = vadd.f32 %v2795, %v311
      %v2830 = vmax.f32 %v2798, 0.0
      %v2831 = vmax.f32 %v2799, 0.0
      %v2832 = vmax.f32 %v2800, 0.0
      %v2833 = vmax.f32 %v2801, 0.0
      %v2834 = vmax.f32 %v2802, 0.0
      %v2835 = vmax.f32 %v2803, 0.0
      %v2836 = vmax.f32 %v2804, 0.0
      %v2837 = vmax.f32 %v2805, 0.0
      %v2838 = vmax.f32 %v2806, 0.0
      %v2839 = vmax.f32 %v2807, 0.0
      %v2840 = vmax.f32 %v2808, 0.0
      %v2841 = vmax.f32 %v2809, 0.0
      %v2842 = vmax.f32 %v2810, 0.0
      %v2843 = vmax.f32 %v2811, 0.0
      %v2844 = vmax.f32 %v2812, 0.0
      %v2845 = vmax.f32 %v2813, 0.0
      %v2846 = vmax.f32 %v2814, 0.0
      %v2847 = vmax.f32 %v2815, 0.0
      %v2848 = vmax.f32 %v2816, 0.0
      %v2849 = vmax.f32 %v2817, 0.0
      %v2850 = vmax.f32 %v2818, 0.0
      %v2851 = vmax.f32 %v2819, 0.0
      %v2852 = vmax.f32 %v2820, 0.0
      %v2853 = vmax.f32 %v2821, 0.0
      %v2854 = vmax.f32 %v2822, 0.0
      %v2855 = vmax.f32 %v2823, 0.0
      %v2856 = vmax.f32 %v2824, 0.0
      %v2857 = vmax.f32 %v2825, 0.0
      %v2858 = vmax.f32 %v2826, 0.0
      %v2859 = vmax.f32 %v2827, 0.0
      %v2860 = vmax.f32 %v2828, 0.0
      %v2861 = vmax.f32 %v2829, 0.0
      %2862 = vst.msk [vmem:[%s278] sm:$0xff] %vm351, %v2830
      %2863 = vst.msk [vmem:[%s278 + $0x8] sm:$0xff] %vm351, %v2831
      %2864 = vst.msk [vmem:[%s278 + $0x10] sm:$0xff] %vm351, %v2832
      %2865 = vst.msk [vmem:[%s278 + $0x18] sm:$0xff] %vm351, %v2833
      %2866 = vst.msk [vmem:[%s278 + $0x20] sm:$0xff] %vm351, %v2834
      %2867 = vst.msk [vmem:[%s278 + $0x28] sm:$0xff] %vm351, %v2835
      %2868 = vst.msk [vmem:[%s278 + $0x30] sm:$0xff] %vm351, %v2836
      %2869 = vst.msk [vmem:[%s278 + $0x38] sm:$0xff] %vm351, %v2837
      %2870 = vst.msk [vmem:[%s278 + $0x40] sm:$0xff] %vm351, %v2838
      %2871 = vst.msk [vmem:[%s278 + $0x48] sm:$0xff] %vm351, %v2839
      %2872 = vst.msk [vmem:[%s278 + $0x50] sm:$0xff] %vm351, %v2840
      %2873 = vst.msk [vmem:[%s278 + $0x58] sm:$0xff] %vm351, %v2841
      %2874 = vst.msk [vmem:[%s278 + $0x60] sm:$0xff] %vm351, %v2842
      %2875 = vst.msk [vmem:[%s278 + $0x68] sm:$0xff] %vm351, %v2843
      %2876 = vst.msk [vmem:[%s278 + $0x70] sm:$0xff] %vm351, %v2844
      %2877 = vst.msk [vmem:[%s278 + $0x78] sm:$0xff] %vm351, %v2845
      %2878 = vst.msk [vmem:[%s278 + $0x80] sm:$0xff] %vm351, %v2846
      %2879 = vst.msk [vmem:[%s278 + $0x88] sm:$0xff] %vm351, %v2847
      %2880 = vst.msk [vmem:[%s278 + $0x90] sm:$0xff] %vm351, %v2848
      %2881 = vst.msk [vmem:[%s278 + $0x98] sm:$0xff] %vm351, %v2849
      %2882 = vst.msk [vmem:[%s278 + $0xa0] sm:$0xff] %vm351, %v2850
      %2883 = vst.msk [vmem:[%s278 + $0xa8] sm:$0xff] %vm351, %v2851
      %2884 = vst.msk [vmem:[%s278 + $0xb0] sm:$0xff] %vm351, %v2852
      %2885 = vst.msk [vmem:[%s278 + $0xb8] sm:$0xff] %vm351, %v2853
      %2886 = vst.msk [vmem:[%s278 + $0xc0] sm:$0xff] %vm351, %v2854
      %2887 = vst.msk [vmem:[%s278 + $0xc8] sm:$0xff] %vm351, %v2855
      %2888 = vst.msk [vmem:[%s278 + $0xd0] sm:$0xff] %vm351, %v2856
      %2889 = vst.msk [vmem:[%s278 + $0xd8] sm:$0xff] %vm351, %v2857
      %2890 = vst.msk [vmem:[%s278 + $0xe0] sm:$0xff] %vm351, %v2858
      %2891 = vst.msk [vmem:[%s278 + $0xe8] sm:$0xff] %vm351, %v2859
      %2892 = vst.msk [vmem:[%s278 + $0xf0] sm:$0xff] %vm351, %v2860
      %2893 = vst.msk [vmem:[%s278 + $0xf8] sm:$0xff] %vm351, %v2861
      %p2894 = scmp.lt.s32.totalorder %s18, 1
      %s2895 = scalar_select %p2894, %s18, 1
      %s2896 = smul.addr %s2895, 32
      %s2897 = smul.addr %s2896, 8
      %s2898 = scalar_lea.vmem %s7, %s2897
      // Predicated region
      $region49: #{tpu_custom_call.1} parent=47 // pred_check
        %p2899 = pneg %p188
      $region50: #{tpu_custom_call.1} parent=47 // pred_check_branch
        %2901 = sbr.rel (%p2899) target = $region52
      $region51: #{tpu_custom_call.1} parent=47 // pred_region
        _
      $region52: #{tpu_custom_call.1} parent=47 // pred_fallthru
        _
    $region48: #{tpu_custom_call.1} parent=5 // pred_fallthru
      _
    %p2902 = scmp.le.s32.totalorder 2, %s13
    // Predicated region
    $region53: #{tpu_custom_call.1} parent=5 // pred_check
      %p2903 = pneg %p2902
    $region54: #{tpu_custom_call.1} parent=5 // pred_check_branch
      %2905 = sbr.rel (%p2903) target = $region56
    $region55: #{tpu_custom_call.1} parent=5 // pred_region
      %s2906 = ssub.s32 %s13, 2
      // Predicated region
      $region57: #{tpu_custom_call.1} parent=55 // pred_check
        %p2907 = pneg %p194
      $region58: #{tpu_custom_call.1} parent=55 // pred_check_branch
        %2909 = sbr.rel (%p2907) target = $region60
      $region59: #{tpu_custom_call.1} parent=55 // pred_region
        %p2910 = scmp.lt.s32.totalorder %s19, 1
        %s2911 = scalar_select %p2910, %s19, 1
        %s2912 = smul.addr %s2911, 32
        %s2913 = smul.addr %s2912, 8
        %s2914 = scalar_lea.vmem %s7, %s2913
      $region60: #{tpu_custom_call.1} parent=55 // pred_fallthru
        _
    $region56: #{tpu_custom_call.1} parent=5 // pred_fallthru
      _
  $region6: #{tpu_custom_call.1} parent=0 // loop_footer
    %s17 = sadd.s32 1, %s13
  $region7: #{tpu_custom_call.1} parent=0 // loop_footer_branch
    %12 = sbr.rel target = $region3
  $region8: #{tpu_custom_call.1} parent=0 // loop_exit
    _

</llo_original>
